<compile_context>
chip_gen: v5e
topology: v5e:2x2
jax: 0.10.0
libtpu: 0.0.40
codegen_flags: <defaults>
</compile_context>

<pallas_src>
import numpy as np
import jax
import jax.numpy as jnp
from jax import lax
from jax.experimental import pallas as pl
from jax.experimental.pallas import tpu as pltpu

# ------------------------- model hyper-parameters (small) -------------------------
B = 2            # batch
S = 8            # max_seq_len
H = 32           # bert hidden_size
N_HEADS = 4
DH = H // N_HEADS
INTER = 64       # bert intermediate size
N_LAYERS = 2
VOCAB = 100
MAX_POS = 64
TYPE_VOCAB = 2
E = 32           # average_distance embedding_dims (default 256, scaled down)
MID = 128        # mid_linear_dims
DIST_VOCAB = 512
EPS = 1e-12      # bert layer_norm_eps
NEG_INF = -1e9
OUT_PAD = 128    # lane-dense classifier output width (real logits live in [:, :2])
D2 = H + E
LANE = 128
R = B * S                 # rows with batch folded in
NR = N_HEADS * R          # rows of the collapsed-head attention


# ------------------------------ in-kernel helpers ----------------------------------
def _ln_rows(x, g, b, eps=EPS):
    """LayerNorm over the last axis; g/b broadcast (1, D)."""
    m = jnp.mean(x, axis=-1, keepdims=True)
    xc = x - m
    v = jnp.mean(xc * xc, axis=-1, keepdims=True)
    return xc * lax.rsqrt(v + eps) * g + b


def _gelu_erf(x):
    """Exact (erf-based) GELU via the Abramowitz-Stegun polynomial (|err| <= 1.5e-7).

    Avoids depending on an erf primitive lowering inside Mosaic while matching HF BERT's
    non-approximate 'gelu'."""
    z = x * 0.7071067811865476
    az = jnp.abs(z)
    t = 1.0 / (1.0 + 0.3275911 * az)
    poly = ((((1.061405429 * t - 1.453152027) * t + 1.421413741) * t
             - 0.284496736) * t + 0.254829592) * t
    erf_abs = 1.0 - poly * jnp.exp(-az * az)
    erf = jnp.where(z >= 0.0, erf_abs, -erf_abs)
    return 0.5 * x * (1.0 + erf)


# ------------------------------ the fused kernel ------------------------------------
def _fused_kernel(emb_ref,      # (R, H)   f32  token+pos+type embedding sum (pre-LN)
                  dist_ref,     # (R, E)   f32  average-distance embedding rows
                  mk_ref,       # (NR, H+2R) f32  [head lane mask | additive attn bias | gather one-hot]
                  wblk_ref,     # (L, 128, 128) bf16  per-layer weight slab
                  bvec_ref,     # (L, 8, 128)   f32   per-layer bias / LN vectors
                  hm_ref,       # (320, 128)    bf16  head matrices (clnW/clnB dense, mid_w, clf_w)
                  hv_ref,       # (8, 128)      f32   head vectors (embLN, clnW/B, LN, mid_b, clf_b)
                  o_ref):       # (R, OUT_PAD)  f32
    f32 = jnp.float32
    bf16 = jnp.bfloat16
    scale = 1.0 / (DH ** 0.5)

    head_mask = mk_ref[:, 0:H]                  # (NR, H)   lane mask per (head, row)
    attn_bias = mk_ref[:, H:H + R]              # (NR, R)   additive (cross-batch + key padding)
    gmat = mk_ref[0:8, H + R:H + 2 * R]         # (8, R)    weapon-token one-hot rows (rows>=2B are 0)

    # ---- BERT embeddings LayerNorm ----
    x = _ln_rows(emb_ref[...], hv_ref[0:1, 0:H], hv_ref[1:2, 0:H])          # (R, H)

    # ---- transformer layers ----
    for l in range(N_LAYERS):
        wqkv = wblk_ref[l, 0:H, 0:3 * H]               # (H, 3H)  bf16
        wo = wblk_ref[l, 0:H, 3 * H:4 * H]             # (H, H)
        wi = wblk_ref[l, H:2 * H, 0:INTER]             # (H, INTER)
        wf = wblk_ref[l, 2 * H:2 * H + INTER, 0:H]     # (INTER, H)

        # fused QKV projection (one MXU push), split by lane slices
        qkv = (jnp.dot(x.astype(bf16), wqkv, preferred_element_type=f32)
               + bvec_ref[l, 0:1, 0:3 * H])                                  # (R, 3H)
        q = qkv[:, 0:H] * scale                      # fold 1/sqrt(dh) into q
        k = qkv[:, H:2 * H]
        v = qkv[:, 2 * H:3 * H]

        # collapsed-head attention: rows = (head, batch*query); head lane mask isolates dh lanes
        q_rep = jnp.concatenate([q] * N_HEADS, axis=0) * head_mask           # (NR, H)
        sc = lax.dot_general(q_rep.astype(bf16), k.astype(bf16),
                             (((1,), (1,)), ((), ())),
                             preferred_element_type=f32)                     # (NR, R)
        sc = sc + attn_bias
        sc = sc - jnp.max(sc, axis=-1, keepdims=True)
        p = jnp.exp(sc)
        p = p * pl.reciprocal(jnp.sum(p, axis=-1, keepdims=True), approx=True)
        ctx_rep = jnp.dot(p.astype(bf16), v.astype(bf16),
                          preferred_element_type=f32) * head_mask            # (NR, H)
        ctx = ctx_rep[0:R]
        for h in range(1, N_HEADS):
            ctx = ctx + ctx_rep[h * R:(h + 1) * R]                           # (R, H)

        attn = (jnp.dot(ctx.astype(bf16), wo, preferred_element_type=f32)
                + bvec_ref[l, 1:2, 0:H])
        x = _ln_rows(attn + x, bvec_ref[l, 2:3, 0:H], bvec_ref[l, 3:4, 0:H])
        inter = _gelu_erf(jnp.dot(x.astype(bf16), wi, preferred_element_type=f32)
                          + bvec_ref[l, 4:5, 0:INTER])
        ffn = (jnp.dot(inter.astype(bf16), wf, preferred_element_type=f32)
               + bvec_ref[l, 5:6, 0:H])
        x = _ln_rows(ffn + x, bvec_ref[l, 6:7, 0:H], bvec_ref[l, 7:8, 0:H])

    seq = x                                                                  # (R, H)

    # ---- trigger head ----
    # _batch_gather of the 2 weapon tokens per batch: one one-hot matmul on the in-VMEM seq output
    g = jnp.dot(gmat, seq, preferred_element_type=f32)                       # (8, H); rows 0..2B-1 valid
    cond = jnp.concatenate([g[0:B], g[B:2 * B]], axis=-1)                    # (B, 2H)

    # ConditionalLayerNorm
    clnwd = hm_ref[0:2 * H, 0:H]                                             # (2H, H) bf16
    clnbd = hm_ref[2 * H:4 * H, 0:H]
    w_pb = (jnp.dot(cond.astype(bf16), clnwd, preferred_element_type=f32)
            + hv_ref[2:3, 0:H])                                              # (B, H)
    b_pb = (jnp.dot(cond.astype(bf16), clnbd, preferred_element_type=f32)
            + hv_ref[3:4, 0:H])                                              # (B, H)

    # expand per-batch weight/bias to per-row (batch folded into rows)
    ridx = lax.broadcasted_iota(jnp.int32, (R, 1), 0)
    w_rows = jnp.zeros((R, H), f32)
    b_rows = jnp.zeros((R, H), f32)
    for b in range(B):
        sel = ((ridx >= b * S) & (ridx < (b + 1) * S)).astype(f32)           # (R, 1)
        w_rows = w_rows + sel * w_pb[b:b + 1]
        b_rows = b_rows + sel * b_pb[b:b + 1]

    m = jnp.mean(seq, axis=-1, keepdims=True)
    xc = seq - m
    var = jnp.mean(xc * xc, axis=-1, keepdims=True)
    cln = xc * lax.rsqrt(var + EPS) * w_rows + b_rows                        # (R, H)

    # concat average-distance embedding + LayerNorm
    cat = jnp.concatenate([cln, dist_ref[...]], axis=-1)                     # (R, D2)
    lnx = _ln_rows(cat, hv_ref[4:5, 0:D2], hv_ref[5:6, 0:D2])

    # mid_linear (Linear -> ReLU -> Dropout[identity]) + classifier + Sigmoid (lane-dense)
    midw = hm_ref[4 * H:4 * H + D2, 0:MID]                                   # (D2, MID)
    clfw = hm_ref[4 * H + D2:4 * H + D2 + MID, 0:OUT_PAD]                    # (MID, OUT_PAD)
    mid = jnp.maximum(jnp.dot(lnx.astype(bf16), midw, preferred_element_type=f32)
                      + hv_ref[6:7, 0:MID], 0.0)
    logits = jax.nn.sigmoid(jnp.dot(mid.astype(bf16), clfw, preferred_element_type=f32)
                            + hv_ref[7:8, 0:OUT_PAD])                        # (R, OUT_PAD)
    o_ref[...] = logits


# ------------------------------ parameter packing (once, outside jit) --------------
def pack_params(p):
    f32 = jnp.float32
    bf16 = jnp.bfloat16

    def row128(v):
        v = jnp.asarray(v, f32).reshape(-1)
        return jnp.pad(v, (0, LANE - v.shape[0]))[None, :]

    wblk, bvec = [], []
    for lp in p["layers"]:
        top = jnp.concatenate([lp["wq"], lp["wk"], lp["wv"], lp["wo"]], axis=1)   # (H, 128)
        mid = jnp.pad(lp["wi"], ((0, 0), (0, LANE - INTER)))                      # (H, 128)
        bot = jnp.pad(lp["wf"], ((0, 0), (0, LANE - H)))                          # (INTER, 128)
        wblk.append(jnp.concatenate([top, mid, bot], axis=0))                     # (128, 128)
        bvec.append(jnp.concatenate([
            row128(jnp.concatenate([lp["bq"], lp["bk"], lp["bv"]])),
            row128(lp["bo"]), row128(lp["ln1_g"]), row128(lp["ln1_b"]),
            row128(lp["bi"]), row128(lp["bf"]), row128(lp["ln2_g"]), row128(lp["ln2_b"]),
        ], axis=0))                                                                # (8, 128)
    wblk = jnp.stack(wblk).astype(bf16)          # (L, 128, 128)
    bvec = jnp.stack(bvec).astype(f32)           # (L, 8, 128)

    head_mats = jnp.concatenate([
        jnp.pad(p["cln_wdense"], ((0, 0), (0, LANE - H))),
        jnp.pad(p["cln_bdense"], ((0, 0), (0, LANE - H))),
        jnp.pad(p["mid_w"], ((0, 0), (0, LANE - MID))),
        jnp.pad(p["clf_w"], ((0, 0), (0, OUT_PAD - 2))),
    ], axis=0).astype(bf16)                      # (320, 128)

    head_vecs = jnp.concatenate([
        row128(p["emb_ln_g"]), row128(p["emb_ln_b"]),
        row128(p["cln_weight"]), row128(p["cln_bias"]),
        row128(p["ln_g"]), row128(p["ln_b"]),
        row128(p["mid_b"]), row128(p["clf_b"]),
    ], axis=0).astype(f32)                       # (8, 128)

    # constant head-selection mask for the collapsed-head attention (rows = (head, batch*query))
    hm = np.zeros((NR, H), np.float32)
    for h in range(N_HEADS):
        hm[h * R:(h + 1) * R, h * DH:(h + 1) * DH] = 1.0

    return dict(word_emb=p["word_emb"], pos_emb=p["pos_emb"], type_emb=p["type_emb"],
                dist_emb=p["dist_emb"], wblk=wblk, bvec=bvec,
                head_mats=head_mats, head_vecs=head_vecs, head_mask=jnp.asarray(hm))


# ------------------------------ wrapper ---------------------------------------------
def trigger_forward_pallas(pk, token_ids, attention_masks, token_type_ids,
                           weapon_label, average_distance):
    f32 = jnp.float32

    # embedding gathers stay in JAX (cheap table lookups); batch is folded into rows
    pos = jnp.arange(S, dtype=jnp.int32)[None, :]
    emb = (pk["word_emb"][token_ids] + pk["pos_emb"][pos]
           + pk["type_emb"][token_type_ids]).astype(f32).reshape(R, H)
    dist = pk["dist_emb"][average_distance].astype(f32).reshape(R, E)

    # additive attention bias: block cross-batch attention and padded keys (tiled per head)
    rb = jnp.arange(R, dtype=jnp.int32) // S
    key_ok = attention_masks.reshape(R) > 0
    allow = (rb[:, None] == rb[None, :]) & key_ok[None, :]
    attn_bias = jnp.tile(jnp.where(allow, 0.0, NEG_INF).astype(f32), (N_HEADS, 1))  # (NR, R)

    # one-hot gather matrix for the 2 weapon tokens per batch (rows ordered token-major)
    tgt = weapon_label.astype(jnp.int32) + (jnp.arange(B, dtype=jnp.int32) * S)[:, None]  # (B, 2)
    gidx = jnp.concatenate([tgt.T.reshape(-1), jnp.full((NR - 2 * B,), -1, jnp.int32)])
    gmat = jax.nn.one_hot(gidx, R, dtype=f32)                                             # (NR, R)

    masks = jnp.concatenate([pk["head_mask"], attn_bias, gmat], axis=1)                   # (NR, H+2R)

    def spec(shape):
        n = len(shape)
        return pl.BlockSpec(shape, lambda i, _n=n: (0,) * _n)

    grid_spec = pltpu.PrefetchScalarGridSpec(
        num_scalar_prefetch=0,
        grid=(1,),                              # single step: whole model fused, no per-step overhead
        in_specs=[
            spec((R, H)),                       # emb
            spec((R, E)),                       # distance embedding
            spec((NR, H + 2 * R)),              # masks / one-hot slab
            spec((N_LAYERS, LANE, LANE)),       # per-layer weight slab (bf16)
            spec((N_LAYERS, 8, LANE)),          # per-layer bias/LN slab (f32)
            spec((4 * H + D2 + MID, LANE)),     # head matrices slab (bf16)
            spec((8, LANE)),                    # head vectors slab (f32)
        ],
        out_specs=spec((R, OUT_PAD)),
    )

    out = pl.pallas_call(
        _fused_kernel,
        out_shape=jax.ShapeDtypeStruct((R, OUT_PAD), jnp.float32),
        grid_spec=grid_spec,
    )(emb, dist, masks, pk["wblk"], pk["bvec"], pk["head_mats"], pk["head_vecs"])
    return out[:, :2].reshape(B, S, 2)                                        # (B, S, 2)


# ------------------------------ pure-JAX reference ----------------------------------
def _ln(x, g, b, eps=EPS):
    m = jnp.mean(x, axis=-1, keepdims=True)
    xc = x - m
    v = jnp.mean(xc * xc, axis=-1, keepdims=True)
    return xc / jnp.sqrt(v + eps) * g + b


def trigger_forward_ref(p, token_ids, attention_masks, token_type_ids,
                        weapon_label, average_distance):
    pos = jnp.arange(S, dtype=jnp.int32)[None, :]
    x = p["word_emb"][token_ids] + p["pos_emb"][pos] + p["type_emb"][token_type_ids]
    x = _ln(x, p["emb_ln_g"], p["emb_ln_b"])
    ext = (1.0 - attention_masks.astype(jnp.float32))[:, None, None, :] * NEG_INF

    def heads(t):
        return t.reshape(B, S, N_HEADS, DH).transpose(0, 2, 1, 3)

    for lp in p["layers"]:
        q, k, v = (x @ lp["wq"] + lp["bq"], x @ lp["wk"] + lp["bk"], x @ lp["wv"] + lp["bv"])
        sc = jnp.einsum("bhqd,bhkd->bhqk", heads(q), heads(k)) / (DH ** 0.5) + ext
        pr = jax.nn.softmax(sc, axis=-1)
        ctx = jnp.einsum("bhqk,bhkd->bhqd", pr, heads(v)).transpose(0, 2, 1, 3).reshape(B, S, H)
        x = _ln(ctx @ lp["wo"] + lp["bo"] + x, lp["ln1_g"], lp["ln1_b"])
        inter = jax.nn.gelu(x @ lp["wi"] + lp["bi"], approximate=False)   # exact erf GELU (HF BERT)
        x = _ln(inter @ lp["wf"] + lp["bf"] + x, lp["ln2_g"], lp["ln2_b"])

    seq_out = x
    cond = jax.vmap(lambda s, idx: s[idx])(seq_out, weapon_label).reshape(B, 1, 2 * H)
    w = cond @ p["cln_wdense"] + p["cln_weight"]
    b = cond @ p["cln_bdense"] + p["cln_bias"]
    m = jnp.mean(seq_out, axis=-1, keepdims=True)
    xc = seq_out - m
    var = jnp.mean(xc * xc, axis=-1, keepdims=True)
    cln = xc / jnp.sqrt(var + EPS) * w + b
    dist = p["dist_emb"][average_distance]
    cat = _ln(jnp.concatenate([cln, dist], axis=-1), p["ln_g"], p["ln_b"])
    mid = jax.nn.relu(cat @ p["mid_w"] + p["mid_b"])
    return jax.nn.sigmoid(mid @ p["clf_w"] + p["clf_b"])


# ------------------------------ parameter init --------------------------------------
def init_params(key):
    keys = iter(jax.random.split(key, 128))
    std = 0.02  # bert initializer_range

    def nrm(shape):
        return jax.random.normal(next(keys), shape, jnp.float32) * std

    p = {
        "word_emb": nrm((VOCAB, H)),
        "pos_emb": nrm((MAX_POS, H)),
        "type_emb": nrm((TYPE_VOCAB, H)),
        "emb_ln_g": jnp.ones((H,), jnp.float32),
        "emb_ln_b": jnp.zeros((H,), jnp.float32),
        "layers": [],
    }
    for _ in range(N_LAYERS):
        p["layers"].append(dict(
            wq=nrm((H, H)), bq=jnp.zeros((H,)),
            wk=nrm((H, H)), bk=jnp.zeros((H,)),
            wv=nrm((H, H)), bv=jnp.zeros((H,)),
            wo=nrm((H, H)), bo=jnp.zeros((H,)),
            ln1_g=jnp.ones((H,)), ln1_b=jnp.zeros((H,)),
            wi=nrm((H, INTER)), bi=jnp.zeros((INTER,)),
            wf=nrm((INTER, H)), bf=jnp.zeros((H,)),
            ln2_g=jnp.ones((H,)), ln2_b=jnp.zeros((H,)),
        ))
    # ConditionalLayerNorm: the module's reset_weight_and_bias() zeroes the dense weights; we use
    # small random values here so the conditional (weapon-gather) path is actually exercised.
    p["cln_weight"] = jnp.ones((H,), jnp.float32)
    p["cln_bias"] = jnp.zeros((H,), jnp.float32)
    p["cln_wdense"] = nrm((2 * H, H))
    p["cln_bdense"] = nrm((2 * H, H))
    # average-distance embedding (Embedding init: normal(0, initializer_range))
    p["dist_emb"] = nrm((DIST_VOCAB, E))
    # final LayerNorm (ones / zeros), mid_linear & classifier (zero biases)
    p["ln_g"] = jnp.ones((H + E,), jnp.float32)
    p["ln_b"] = jnp.zeros((H + E,), jnp.float32)
    p["mid_w"] = nrm((H + E, MID))
    p["mid_b"] = jnp.zeros((MID,), jnp.float32)
    p["clf_w"] = nrm((MID, 2))
    p["clf_b"] = jnp.zeros((2,), jnp.float32)
    return p


# ----------------------------------- main -------------------------------------------
if __name__ == "__main__":
    root = jax.random.PRNGKey(0)
    kp, kt, kw, kd, ktt = jax.random.split(root, 5)

    params = init_params(kp)
    packed = pack_params(params)   # one-time weight packing, outside jit

    token_ids = jax.random.randint(kt, (B, S), 0, VOCAB, dtype=jnp.int32)
    token_type_ids = jax.random.randint(ktt, (B, S), 0, TYPE_VOCAB, dtype=jnp.int32)
    # lengths [8, 6] -> exercise the attention mask
    lengths = jnp.array([S, S - 2], dtype=jnp.int32)
    attention_masks = (jnp.arange(S, dtype=jnp.int32)[None, :] < lengths[:, None]).astype(jnp.int32)
    weapon_label = jax.random.randint(kw, (B, 2), 0, S, dtype=jnp.int32)
    average_distance = jax.random.randint(kd, (B, S), 0, DIST_VOCAB, dtype=jnp.int32)

    fwd = jax.jit(trigger_forward_pallas)
    logits = fwd(packed, token_ids, attention_masks, token_type_ids,
                 weapon_label, average_distance)
    logits = jax.block_until_ready(logits)

    ref = jax.jit(trigger_forward_ref)(params, token_ids, attention_masks,
                                       token_type_ids, weapon_label, average_distance)
    ref = jax.block_until_ready(ref)

    assert logits.shape == (B, S, 2), logits.shape
    assert bool(jnp.all(jnp.isfinite(logits)))
    assert bool(jnp.allclose(logits, ref, atol=2e-2, rtol=2e-2)), \
        f"max abs diff {float(jnp.max(jnp.abs(logits - ref)))}"
    print("KERNEL_OK")
</pallas_src>

<mosaic_0001>
module attributes {stable_mosaic.version = 11 : i64} {
  func.func @_fused_kernel(%arg0: i32, %arg1: memref<16x32xf32, #tpu.memory_space<vmem>>, %arg2: memref<16x32xf32, #tpu.memory_space<vmem>>, %arg3: memref<64x64xf32, #tpu.memory_space<vmem>>, %arg4: memref<2x128x128xbf16, #tpu.memory_space<vmem>>, %arg5: memref<2x8x128xf32, #tpu.memory_space<vmem>>, %arg6: memref<320x128xbf16, #tpu.memory_space<vmem>>, %arg7: memref<8x128xf32, #tpu.memory_space<vmem>>, %arg8: memref<16x128xf32, #tpu.memory_space<vmem>>) attributes {dimension_semantics = [#tpu.dimension_semantics<arbitrary>], iteration_bounds = array<i64: 1>, scalar_prefetch = 0 : i64, scratch_operands = 0 : i64, tpu.core_type = #tpu.core_type<tc>, window_params = [{pipeline_mode = #tpu.pipeline_mode<synchronous>, transform_indices = @transform_0, window_bounds = array<i64: 16, 32>}, {pipeline_mode = #tpu.pipeline_mode<synchronous>, transform_indices = @transform_1, window_bounds = array<i64: 16, 32>}, {pipeline_mode = #tpu.pipeline_mode<synchronous>, transform_indices = @transform_2, window_bounds = array<i64: 64, 64>}, {pipeline_mode = #tpu.pipeline_mode<synchronous>, transform_indices = @transform_3, window_bounds = array<i64: 2, 128, 128>}, {pipeline_mode = #tpu.pipeline_mode<synchronous>, transform_indices = @transform_4, window_bounds = array<i64: 2, 8, 128>}, {pipeline_mode = #tpu.pipeline_mode<synchronous>, transform_indices = @transform_5, window_bounds = array<i64: 320, 128>}, {pipeline_mode = #tpu.pipeline_mode<synchronous>, transform_indices = @transform_6, window_bounds = array<i64: 8, 128>}, {pipeline_mode = #tpu.pipeline_mode<synchronous>, transform_indices = @transform_7, window_bounds = array<i64: 16, 128>}]} {
    %c0 = arith.constant 0 : index
    %c0_0 = arith.constant 0 : index
    %0 = vector.load %arg3[%c0, %c0_0] : memref<64x64xf32, #tpu.memory_space<vmem>>, vector<64x32xf32>
    %c0_1 = arith.constant 0 : index
    %c32 = arith.constant 32 : index
    %1 = vector.load %arg3[%c0_1, %c32] : memref<64x64xf32, #tpu.memory_space<vmem>>, vector<64x16xf32>
    %c0_2 = arith.constant 0 : index
    %c48 = arith.constant 48 : index
    %2 = vector.load %arg3[%c0_2, %c48] : memref<64x64xf32, #tpu.memory_space<vmem>>, vector<8x16xf32>
    %c0_3 = arith.constant 0 : index
    %c0_4 = arith.constant 0 : index
    %3 = vector.load %arg1[%c0_3, %c0_4] : memref<16x32xf32, #tpu.memory_space<vmem>>, vector<16x32xf32>
    %c0_5 = arith.constant 0 : index
    %c0_6 = arith.constant 0 : index
    %4 = vector.load %arg7[%c0_5, %c0_6] : memref<8x128xf32, #tpu.memory_space<vmem>>, vector<1x32xf32>
    %c1 = arith.constant 1 : index
    %c0_7 = arith.constant 0 : index
    %5 = vector.load %arg7[%c1, %c0_7] : memref<8x128xf32, #tpu.memory_space<vmem>>, vector<1x32xf32>
    %cst = arith.constant dense<0.000000e+00> : vector<16xf32>
    %6 = vector.multi_reduction <add>, %3, %cst [1] : vector<16x32xf32> to vector<16xf32>
    %7 = vector.shape_cast %6 : vector<16xf32> to vector<16x1xf32>
    %cst_8 = arith.constant 3.200000e+01 : f32
    %8 = vector.broadcast %cst_8 : f32 to vector<16x1xf32>
    %9 = arith.divf %7, %8 : vector<16x1xf32>
    %10 = vector.broadcast %9 : vector<16x1xf32> to vector<16x32xf32>
    %11 = arith.subf %3, %10 : vector<16x32xf32>
    %12 = arith.mulf %11, %11 : vector<16x32xf32>
    %cst_9 = arith.constant dense<0.000000e+00> : vector<16xf32>
    %13 = vector.multi_reduction <add>, %12, %cst_9 [1] : vector<16x32xf32> to vector<16xf32>
    %14 = vector.shape_cast %13 : vector<16xf32> to vector<16x1xf32>
    %cst_10 = arith.constant 3.200000e+01 : f32
    %15 = vector.broadcast %cst_10 : f32 to vector<16x1xf32>
    %16 = arith.divf %14, %15 : vector<16x1xf32>
    %cst_11 = arith.constant 9.99999996E-13 : f32
    %17 = vector.broadcast %cst_11 : f32 to vector<16x1xf32>
    %18 = arith.addf %16, %17 : vector<16x1xf32>
    %19 = math.rsqrt %18 : vector<16x1xf32>
    %20 = vector.broadcast %19 : vector<16x1xf32> to vector<16x32xf32>
    %21 = arith.mulf %11, %20 : vector<16x32xf32>
    %22 = vector.broadcast %4 : vector<1x32xf32> to vector<16x32xf32>
    %23 = arith.mulf %21, %22 : vector<16x32xf32>
    %24 = vector.broadcast %5 : vector<1x32xf32> to vector<16x32xf32>
    %25 = arith.addf %23, %24 : vector<16x32xf32>
    %c0_12 = arith.constant 0 : index
    %c0_13 = arith.constant 0 : index
    %c0_14 = arith.constant 0 : index
    %26 = vector.load %arg4[%c0_12, %c0_13, %c0_14] : memref<2x128x128xbf16, #tpu.memory_space<vmem>>, vector<1x32x96xbf16>
    %27 = vector.shape_cast %26 : vector<1x32x96xbf16> to vector<32x96xbf16>
    %c0_15 = arith.constant 0 : index
    %c0_16 = arith.constant 0 : index
    %c96 = arith.constant 96 : index
    %28 = vector.load %arg4[%c0_15, %c0_16, %c96] : memref<2x128x128xbf16, #tpu.memory_space<vmem>>, vector<1x32x32xbf16>
    %29 = vector.shape_cast %28 : vector<1x32x32xbf16> to vector<32x32xbf16>
    %c0_17 = arith.constant 0 : index
    %c32_18 = arith.constant 32 : index
    %c0_19 = arith.constant 0 : index
    %30 = vector.load %arg4[%c0_17, %c32_18, %c0_19] : memref<2x128x128xbf16, #tpu.memory_space<vmem>>, vector<1x32x64xbf16>
    %31 = vector.shape_cast %30 : vector<1x32x64xbf16> to vector<32x64xbf16>
    %c0_20 = arith.constant 0 : index
    %c64 = arith.constant 64 : index
    %c0_21 = arith.constant 0 : index
    %32 = vector.load %arg4[%c0_20, %c64, %c0_21] : memref<2x128x128xbf16, #tpu.memory_space<vmem>>, vector<1x64x32xbf16>
    %33 = vector.shape_cast %32 : vector<1x64x32xbf16> to vector<64x32xbf16>
    %34 = arith.truncf %25 : vector<16x32xf32> to vector<16x32xbf16>
    %cst_22 = arith.constant dense<0.000000e+00> : vector<16x96xf32>
    %35 = tpu.matmul %34, %27, %cst_22 {dimension_numbers = #tpu.dot_dimension_numbers<[1], [0], [0], [1], [0, 0, 1, 1], [], []>} : vector<16x32xbf16>, vector<32x96xbf16>, vector<16x96xf32> -> vector<16x96xf32>
    %c0_23 = arith.constant 0 : index
    %c0_24 = arith.constant 0 : index
    %c0_25 = arith.constant 0 : index
    %36 = vector.load %arg5[%c0_23, %c0_24, %c0_25] : memref<2x8x128xf32, #tpu.memory_space<vmem>>, vector<1x1x96xf32>
    %37 = vector.shape_cast %36 : vector<1x1x96xf32> to vector<1x96xf32>
    %38 = vector.broadcast %37 : vector<1x96xf32> to vector<16x96xf32>
    %39 = arith.addf %35, %38 : vector<16x96xf32>
    %40 = vector.extract_strided_slice %39 {offsets = [0, 0], sizes = [16, 32], strides = [1, 1]} : vector<16x96xf32> to vector<16x32xf32>
    %cst_26 = arith.constant 0.353553385 : f32
    %41 = vector.broadcast %cst_26 : f32 to vector<16x32xf32>
    %42 = arith.mulf %40, %41 : vector<16x32xf32>
    %43 = vector.extract_strided_slice %39 {offsets = [0, 32], sizes = [16, 32], strides = [1, 1]} : vector<16x96xf32> to vector<16x32xf32>
    %44 = vector.extract_strided_slice %39 {offsets = [0, 64], sizes = [16, 32], strides = [1, 1]} : vector<16x96xf32> to vector<16x32xf32>
    %45 = tpu.concatenate %42, %42, %42, %42 in 0 : vector<16x32xf32>, vector<16x32xf32>, vector<16x32xf32>, vector<16x32xf32> -> vector<64x32xf32>
    %46 = arith.mulf %45, %0 : vector<64x32xf32>
    %47 = arith.truncf %46 : vector<64x32xf32> to vector<64x32xbf16>
    %48 = arith.truncf %43 : vector<16x32xf32> to vector<16x32xbf16>
    %cst_27 = arith.constant dense<0.000000e+00> : vector<64x16xf32>
    %49 = tpu.matmul %47, %48, %cst_27 {dimension_numbers = #tpu.dot_dimension_numbers<[1], [1], [0], [0], [0, 0, 1, 0], [], []>} : vector<64x32xbf16>, vector<16x32xbf16>, vector<64x16xf32> -> vector<64x16xf32>
    %50 = arith.addf %49, %1 : vector<64x16xf32>
    %cst_28 = arith.constant dense<0xFF800000> : vector<64xf32>
    %51 = vector.multi_reduction <maximumf>, %50, %cst_28 [1] : vector<64x16xf32> to vector<64xf32>
    %52 = vector.shape_cast %51 : vector<64xf32> to vector<64x1xf32>
    %53 = vector.broadcast %52 : vector<64x1xf32> to vector<64x16xf32>
    %54 = arith.subf %50, %53 : vector<64x16xf32>
    %55 = math.exp %54 : vector<64x16xf32>
    %cst_29 = arith.constant dense<0.000000e+00> : vector<64xf32>
    %56 = vector.multi_reduction <add>, %55, %cst_29 [1] : vector<64x16xf32> to vector<64xf32>
    %57 = vector.shape_cast %56 : vector<64xf32> to vector<64x1xf32>
    %58 = tpu.reciprocal %57 {approx = true} : vector<64x1xf32> -> vector<64x1xf32>
    %59 = vector.broadcast %58 : vector<64x1xf32> to vector<64x16xf32>
    %60 = arith.mulf %55, %59 : vector<64x16xf32>
    %61 = arith.truncf %60 : vector<64x16xf32> to vector<64x16xbf16>
    %62 = arith.truncf %44 : vector<16x32xf32> to vector<16x32xbf16>
    %cst_30 = arith.constant dense<0.000000e+00> : vector<64x32xf32>
    %63 = tpu.matmul %61, %62, %cst_30 {dimension_numbers = #tpu.dot_dimension_numbers<[1], [0], [0], [1], [0, 0, 1, 1], [], []>} : vector<64x16xbf16>, vector<16x32xbf16>, vector<64x32xf32> -> vector<64x32xf32>
    %64 = arith.mulf %63, %0 : vector<64x32xf32>
    %65 = vector.extract_strided_slice %64 {offsets = [0, 0], sizes = [16, 32], strides = [1, 1]} : vector<64x32xf32> to vector<16x32xf32>
    %66 = vector.extract_strided_slice %64 {offsets = [16, 0], sizes = [16, 32], strides = [1, 1]} : vector<64x32xf32> to vector<16x32xf32>
    %67 = arith.addf %65, %66 : vector<16x32xf32>
    %68 = vector.extract_strided_slice %64 {offsets = [32, 0], sizes = [16, 32], strides = [1, 1]} : vector<64x32xf32> to vector<16x32xf32>
    %69 = arith.addf %67, %68 : vector<16x32xf32>
    %70 = vector.extract_strided_slice %64 {offsets = [48, 0], sizes = [16, 32], strides = [1, 1]} : vector<64x32xf32> to vector<16x32xf32>
    %71 = arith.addf %69, %70 : vector<16x32xf32>
    %72 = arith.truncf %71 : vector<16x32xf32> to vector<16x32xbf16>
    %cst_31 = arith.constant dense<0.000000e+00> : vector<16x32xf32>
    %73 = tpu.matmul %72, %29, %cst_31 {dimension_numbers = #tpu.dot_dimension_numbers<[1], [0], [0], [1], [0, 0, 1, 1], [], []>} : vector<16x32xbf16>, vector<32x32xbf16>, vector<16x32xf32> -> vector<16x32xf32>
    %c0_32 = arith.constant 0 : index
    %c1_33 = arith.constant 1 : index
    %c0_34 = arith.constant 0 : index
    %74 = vector.load %arg5[%c0_32, %c1_33, %c0_34] : memref<2x8x128xf32, #tpu.memory_space<vmem>>, vector<1x1x32xf32>
    %75 = vector.shape_cast %74 : vector<1x1x32xf32> to vector<1x32xf32>
    %76 = vector.broadcast %75 : vector<1x32xf32> to vector<16x32xf32>
    %77 = arith.addf %73, %76 : vector<16x32xf32>
    %78 = arith.addf %77, %25 : vector<16x32xf32>
    %c0_35 = arith.constant 0 : index
    %c2 = arith.constant 2 : index
    %c0_36 = arith.constant 0 : index
    %79 = vector.load %arg5[%c0_35, %c2, %c0_36] : memref<2x8x128xf32, #tpu.memory_space<vmem>>, vector<1x1x32xf32>
    %80 = vector.shape_cast %79 : vector<1x1x32xf32> to vector<1x32xf32>
    %c0_37 = arith.constant 0 : index
    %c3 = arith.constant 3 : index
    %c0_38 = arith.constant 0 : index
    %81 = vector.load %arg5[%c0_37, %c3, %c0_38] : memref<2x8x128xf32, #tpu.memory_space<vmem>>, vector<1x1x32xf32>
    %82 = vector.shape_cast %81 : vector<1x1x32xf32> to vector<1x32xf32>
    %cst_39 = arith.constant dense<0.000000e+00> : vector<16xf32>
    %83 = vector.multi_reduction <add>, %78, %cst_39 [1] : vector<16x32xf32> to vector<16xf32>
    %84 = vector.shape_cast %83 : vector<16xf32> to vector<16x1xf32>
    %cst_40 = arith.constant 3.200000e+01 : f32
    %85 = vector.broadcast %cst_40 : f32 to vector<16x1xf32>
    %86 = arith.divf %84, %85 : vector<16x1xf32>
    %87 = vector.broadcast %86 : vector<16x1xf32> to vector<16x32xf32>
    %88 = arith.subf %78, %87 : vector<16x32xf32>
    %89 = arith.mulf %88, %88 : vector<16x32xf32>
    %cst_41 = arith.constant dense<0.000000e+00> : vector<16xf32>
    %90 = vector.multi_reduction <add>, %89, %cst_41 [1] : vector<16x32xf32> to vector<16xf32>
    %91 = vector.shape_cast %90 : vector<16xf32> to vector<16x1xf32>
    %cst_42 = arith.constant 3.200000e+01 : f32
    %92 = vector.broadcast %cst_42 : f32 to vector<16x1xf32>
    %93 = arith.divf %91, %92 : vector<16x1xf32>
    %cst_43 = arith.constant 9.99999996E-13 : f32
    %94 = vector.broadcast %cst_43 : f32 to vector<16x1xf32>
    %95 = arith.addf %93, %94 : vector<16x1xf32>
    %96 = math.rsqrt %95 : vector<16x1xf32>
    %97 = vector.broadcast %96 : vector<16x1xf32> to vector<16x32xf32>
    %98 = arith.mulf %88, %97 : vector<16x32xf32>
    %99 = vector.broadcast %80 : vector<1x32xf32> to vector<16x32xf32>
    %100 = arith.mulf %98, %99 : vector<16x32xf32>
    %101 = vector.broadcast %82 : vector<1x32xf32> to vector<16x32xf32>
    %102 = arith.addf %100, %101 : vector<16x32xf32>
    %103 = arith.truncf %102 : vector<16x32xf32> to vector<16x32xbf16>
    %cst_44 = arith.constant dense<0.000000e+00> : vector<16x64xf32>
    %104 = tpu.matmul %103, %31, %cst_44 {dimension_numbers = #tpu.dot_dimension_numbers<[1], [0], [0], [1], [0, 0, 1, 1], [], []>} : vector<16x32xbf16>, vector<32x64xbf16>, vector<16x64xf32> -> vector<16x64xf32>
    %c0_45 = arith.constant 0 : index
    %c4 = arith.constant 4 : index
    %c0_46 = arith.constant 0 : index
    %105 = vector.load %arg5[%c0_45, %c4, %c0_46] : memref<2x8x128xf32, #tpu.memory_space<vmem>>, vector<1x1x64xf32>
    %106 = vector.shape_cast %105 : vector<1x1x64xf32> to vector<1x64xf32>
    %107 = vector.broadcast %106 : vector<1x64xf32> to vector<16x64xf32>
    %108 = arith.addf %104, %107 : vector<16x64xf32>
    %cst_47 = arith.constant 0.707106769 : f32
    %109 = vector.broadcast %cst_47 : f32 to vector<16x64xf32>
    %110 = arith.mulf %108, %109 : vector<16x64xf32>
    %111 = math.absf %110 : vector<16x64xf32>
    %cst_48 = arith.constant 0.327591091 : f32
    %112 = vector.broadcast %cst_48 : f32 to vector<16x64xf32>
    %113 = arith.mulf %112, %111 : vector<16x64xf32>
    %cst_49 = arith.constant 1.000000e+00 : f32
    %114 = vector.broadcast %cst_49 : f32 to vector<16x64xf32>
    %115 = arith.addf %114, %113 : vector<16x64xf32>
    %cst_50 = arith.constant 1.000000e+00 : f32
    %116 = vector.broadcast %cst_50 : f32 to vector<16x64xf32>
    %117 = arith.divf %116, %115 : vector<16x64xf32>
    %cst_51 = arith.constant 1.06140542 : f32
    %118 = vector.broadcast %cst_51 : f32 to vector<16x64xf32>
    %119 = arith.mulf %118, %117 : vector<16x64xf32>
    %cst_52 = arith.constant 1.45315206 : f32
    %120 = vector.broadcast %cst_52 : f32 to vector<16x64xf32>
    %121 = arith.subf %119, %120 : vector<16x64xf32>
    %122 = arith.mulf %121, %117 : vector<16x64xf32>
    %cst_53 = arith.constant 1.42141378 : f32
    %123 = vector.broadcast %cst_53 : f32 to vector<16x64xf32>
    %124 = arith.addf %122, %123 : vector<16x64xf32>
    %125 = arith.mulf %124, %117 : vector<16x64xf32>
    %cst_54 = arith.constant 0.284496725 : f32
    %126 = vector.broadcast %cst_54 : f32 to vector<16x64xf32>
    %127 = arith.subf %125, %126 : vector<16x64xf32>
    %128 = arith.mulf %127, %117 : vector<16x64xf32>
    %cst_55 = arith.constant 0.254829586 : f32
    %129 = vector.broadcast %cst_55 : f32 to vector<16x64xf32>
    %130 = arith.addf %128, %129 : vector<16x64xf32>
    %131 = arith.mulf %130, %117 : vector<16x64xf32>
    %cst_56 = arith.constant 0.000000e+00 : f32
    %132 = vector.broadcast %cst_56 : f32 to vector<16x64xf32>
    %133 = arith.subf %132, %111 : vector<16x64xf32>
    %134 = arith.mulf %133, %111 : vector<16x64xf32>
    %135 = math.exp %134 : vector<16x64xf32>
    %136 = arith.mulf %131, %135 : vector<16x64xf32>
    %cst_57 = arith.constant 1.000000e+00 : f32
    %137 = vector.broadcast %cst_57 : f32 to vector<16x64xf32>
    %138 = arith.subf %137, %136 : vector<16x64xf32>
    %cst_58 = arith.constant 0.000000e+00 : f32
    %139 = vector.broadcast %cst_58 : f32 to vector<16x64xf32>
    %140 = arith.cmpf oge, %110, %139 : vector<16x64xf32>
    %cst_59 = arith.constant 0.000000e+00 : f32
    %141 = vector.broadcast %cst_59 : f32 to vector<16x64xf32>
    %142 = arith.subf %141, %138 : vector<16x64xf32>
    %143 = arith.select %140, %138, %142 : vector<16x64xi1>, vector<16x64xf32>
    %cst_60 = arith.constant 5.000000e-01 : f32
    %144 = vector.broadcast %cst_60 : f32 to vector<16x64xf32>
    %145 = arith.mulf %144, %108 : vector<16x64xf32>
    %cst_61 = arith.constant 1.000000e+00 : f32
    %146 = vector.broadcast %cst_61 : f32 to vector<16x64xf32>
    %147 = arith.addf %146, %143 : vector<16x64xf32>
    %148 = arith.mulf %145, %147 : vector<16x64xf32>
    %149 = arith.truncf %148 : vector<16x64xf32> to vector<16x64xbf16>
    %cst_62 = arith.constant dense<0.000000e+00> : vector<16x32xf32>
    %150 = tpu.matmul %149, %33, %cst_62 {dimension_numbers = #tpu.dot_dimension_numbers<[1], [0], [0], [1], [0, 0, 1, 1], [], []>} : vector<16x64xbf16>, vector<64x32xbf16>, vector<16x32xf32> -> vector<16x32xf32>
    %c0_63 = arith.constant 0 : index
    %c5 = arith.constant 5 : index
    %c0_64 = arith.constant 0 : index
    %151 = vector.load %arg5[%c0_63, %c5, %c0_64] : memref<2x8x128xf32, #tpu.memory_space<vmem>>, vector<1x1x32xf32>
    %152 = vector.shape_cast %151 : vector<1x1x32xf32> to vector<1x32xf32>
    %153 = vector.broadcast %152 : vector<1x32xf32> to vector<16x32xf32>
    %154 = arith.addf %150, %153 : vector<16x32xf32>
    %155 = arith.addf %154, %102 : vector<16x32xf32>
    %c0_65 = arith.constant 0 : index
    %c6 = arith.constant 6 : index
    %c0_66 = arith.constant 0 : index
    %156 = vector.load %arg5[%c0_65, %c6, %c0_66] : memref<2x8x128xf32, #tpu.memory_space<vmem>>, vector<1x1x32xf32>
    %157 = vector.shape_cast %156 : vector<1x1x32xf32> to vector<1x32xf32>
    %c0_67 = arith.constant 0 : index
    %c7 = arith.constant 7 : index
    %c0_68 = arith.constant 0 : index
    %158 = vector.load %arg5[%c0_67, %c7, %c0_68] : memref<2x8x128xf32, #tpu.memory_space<vmem>>, vector<1x1x32xf32>
    %159 = vector.shape_cast %158 : vector<1x1x32xf32> to vector<1x32xf32>
    %cst_69 = arith.constant dense<0.000000e+00> : vector<16xf32>
    %160 = vector.multi_reduction <add>, %155, %cst_69 [1] : vector<16x32xf32> to vector<16xf32>
    %161 = vector.shape_cast %160 : vector<16xf32> to vector<16x1xf32>
    %cst_70 = arith.constant 3.200000e+01 : f32
    %162 = vector.broadcast %cst_70 : f32 to vector<16x1xf32>
    %163 = arith.divf %161, %162 : vector<16x1xf32>
    %164 = vector.broadcast %163 : vector<16x1xf32> to vector<16x32xf32>
    %165 = arith.subf %155, %164 : vector<16x32xf32>
    %166 = arith.mulf %165, %165 : vector<16x32xf32>
    %cst_71 = arith.constant dense<0.000000e+00> : vector<16xf32>
    %167 = vector.multi_reduction <add>, %166, %cst_71 [1] : vector<16x32xf32> to vector<16xf32>
    %168 = vector.shape_cast %167 : vector<16xf32> to vector<16x1xf32>
    %cst_72 = arith.constant 3.200000e+01 : f32
    %169 = vector.broadcast %cst_72 : f32 to vector<16x1xf32>
    %170 = arith.divf %168, %169 : vector<16x1xf32>
    %cst_73 = arith.constant 9.99999996E-13 : f32
    %171 = vector.broadcast %cst_73 : f32 to vector<16x1xf32>
    %172 = arith.addf %170, %171 : vector<16x1xf32>
    %173 = math.rsqrt %172 : vector<16x1xf32>
    %174 = vector.broadcast %173 : vector<16x1xf32> to vector<16x32xf32>
    %175 = arith.mulf %165, %174 : vector<16x32xf32>
    %176 = vector.broadcast %157 : vector<1x32xf32> to vector<16x32xf32>
    %177 = arith.mulf %175, %176 : vector<16x32xf32>
    %178 = vector.broadcast %159 : vector<1x32xf32> to vector<16x32xf32>
    %179 = arith.addf %177, %178 : vector<16x32xf32>
    %c1_74 = arith.constant 1 : index
    %c0_75 = arith.constant 0 : index
    %c0_76 = arith.constant 0 : index
    %180 = vector.load %arg4[%c1_74, %c0_75, %c0_76] : memref<2x128x128xbf16, #tpu.memory_space<vmem>>, vector<1x32x96xbf16>
    %181 = vector.shape_cast %180 : vector<1x32x96xbf16> to vector<32x96xbf16>
    %c1_77 = arith.constant 1 : index
    %c0_78 = arith.constant 0 : index
    %c96_79 = arith.constant 96 : index
    %182 = vector.load %arg4[%c1_77, %c0_78, %c96_79] : memref<2x128x128xbf16, #tpu.memory_space<vmem>>, vector<1x32x32xbf16>
    %183 = vector.shape_cast %182 : vector<1x32x32xbf16> to vector<32x32xbf16>
    %c1_80 = arith.constant 1 : index
    %c32_81 = arith.constant 32 : index
    %c0_82 = arith.constant 0 : index
    %184 = vector.load %arg4[%c1_80, %c32_81, %c0_82] : memref<2x128x128xbf16, #tpu.memory_space<vmem>>, vector<1x32x64xbf16>
    %185 = vector.shape_cast %184 : vector<1x32x64xbf16> to vector<32x64xbf16>
    %c1_83 = arith.constant 1 : index
    %c64_84 = arith.constant 64 : index
    %c0_85 = arith.constant 0 : index
    %186 = vector.load %arg4[%c1_83, %c64_84, %c0_85] : memref<2x128x128xbf16, #tpu.memory_space<vmem>>, vector<1x64x32xbf16>
    %187 = vector.shape_cast %186 : vector<1x64x32xbf16> to vector<64x32xbf16>
    %188 = arith.truncf %179 : vector<16x32xf32> to vector<16x32xbf16>
    %cst_86 = arith.constant dense<0.000000e+00> : vector<16x96xf32>
    %189 = tpu.matmul %188, %181, %cst_86 {dimension_numbers = #tpu.dot_dimension_numbers<[1], [0], [0], [1], [0, 0, 1, 1], [], []>} : vector<16x32xbf16>, vector<32x96xbf16>, vector<16x96xf32> -> vector<16x96xf32>
    %c1_87 = arith.constant 1 : index
    %c0_88 = arith.constant 0 : index
    %c0_89 = arith.constant 0 : index
    %190 = vector.load %arg5[%c1_87, %c0_88, %c0_89] : memref<2x8x128xf32, #tpu.memory_space<vmem>>, vector<1x1x96xf32>
    %191 = vector.shape_cast %190 : vector<1x1x96xf32> to vector<1x96xf32>
    %192 = vector.broadcast %191 : vector<1x96xf32> to vector<16x96xf32>
    %193 = arith.addf %189, %192 : vector<16x96xf32>
    %194 = vector.extract_strided_slice %193 {offsets = [0, 0], sizes = [16, 32], strides = [1, 1]} : vector<16x96xf32> to vector<16x32xf32>
    %cst_90 = arith.constant 0.353553385 : f32
    %195 = vector.broadcast %cst_90 : f32 to vector<16x32xf32>
    %196 = arith.mulf %194, %195 : vector<16x32xf32>
    %197 = vector.extract_strided_slice %193 {offsets = [0, 32], sizes = [16, 32], strides = [1, 1]} : vector<16x96xf32> to vector<16x32xf32>
    %198 = vector.extract_strided_slice %193 {offsets = [0, 64], sizes = [16, 32], strides = [1, 1]} : vector<16x96xf32> to vector<16x32xf32>
    %199 = tpu.concatenate %196, %196, %196, %196 in 0 : vector<16x32xf32>, vector<16x32xf32>, vector<16x32xf32>, vector<16x32xf32> -> vector<64x32xf32>
    %200 = arith.mulf %199, %0 : vector<64x32xf32>
    %201 = arith.truncf %200 : vector<64x32xf32> to vector<64x32xbf16>
    %202 = arith.truncf %197 : vector<16x32xf32> to vector<16x32xbf16>
    %cst_91 = arith.constant dense<0.000000e+00> : vector<64x16xf32>
    %203 = tpu.matmul %201, %202, %cst_91 {dimension_numbers = #tpu.dot_dimension_numbers<[1], [1], [0], [0], [0, 0, 1, 0], [], []>} : vector<64x32xbf16>, vector<16x32xbf16>, vector<64x16xf32> -> vector<64x16xf32>
    %204 = arith.addf %203, %1 : vector<64x16xf32>
    %cst_92 = arith.constant dense<0xFF800000> : vector<64xf32>
    %205 = vector.multi_reduction <maximumf>, %204, %cst_92 [1] : vector<64x16xf32> to vector<64xf32>
    %206 = vector.shape_cast %205 : vector<64xf32> to vector<64x1xf32>
    %207 = vector.broadcast %206 : vector<64x1xf32> to vector<64x16xf32>
    %208 = arith.subf %204, %207 : vector<64x16xf32>
    %209 = math.exp %208 : vector<64x16xf32>
    %cst_93 = arith.constant dense<0.000000e+00> : vector<64xf32>
    %210 = vector.multi_reduction <add>, %209, %cst_93 [1] : vector<64x16xf32> to vector<64xf32>
    %211 = vector.shape_cast %210 : vector<64xf32> to vector<64x1xf32>
    %212 = tpu.reciprocal %211 {approx = true} : vector<64x1xf32> -> vector<64x1xf32>
    %213 = vector.broadcast %212 : vector<64x1xf32> to vector<64x16xf32>
    %214 = arith.mulf %209, %213 : vector<64x16xf32>
    %215 = arith.truncf %214 : vector<64x16xf32> to vector<64x16xbf16>
    %216 = arith.truncf %198 : vector<16x32xf32> to vector<16x32xbf16>
    %cst_94 = arith.constant dense<0.000000e+00> : vector<64x32xf32>
    %217 = tpu.matmul %215, %216, %cst_94 {dimension_numbers = #tpu.dot_dimension_numbers<[1], [0], [0], [1], [0, 0, 1, 1], [], []>} : vector<64x16xbf16>, vector<16x32xbf16>, vector<64x32xf32> -> vector<64x32xf32>
    %218 = arith.mulf %217, %0 : vector<64x32xf32>
    %219 = vector.extract_strided_slice %218 {offsets = [0, 0], sizes = [16, 32], strides = [1, 1]} : vector<64x32xf32> to vector<16x32xf32>
    %220 = vector.extract_strided_slice %218 {offsets = [16, 0], sizes = [16, 32], strides = [1, 1]} : vector<64x32xf32> to vector<16x32xf32>
    %221 = arith.addf %219, %220 : vector<16x32xf32>
    %222 = vector.extract_strided_slice %218 {offsets = [32, 0], sizes = [16, 32], strides = [1, 1]} : vector<64x32xf32> to vector<16x32xf32>
    %223 = arith.addf %221, %222 : vector<16x32xf32>
    %224 = vector.extract_strided_slice %218 {offsets = [48, 0], sizes = [16, 32], strides = [1, 1]} : vector<64x32xf32> to vector<16x32xf32>
    %225 = arith.addf %223, %224 : vector<16x32xf32>
    %226 = arith.truncf %225 : vector<16x32xf32> to vector<16x32xbf16>
    %cst_95 = arith.constant dense<0.000000e+00> : vector<16x32xf32>
    %227 = tpu.matmul %226, %183, %cst_95 {dimension_numbers = #tpu.dot_dimension_numbers<[1], [0], [0], [1], [0, 0, 1, 1], [], []>} : vector<16x32xbf16>, vector<32x32xbf16>, vector<16x32xf32> -> vector<16x32xf32>
    %c1_96 = arith.constant 1 : index
    %c1_97 = arith.constant 1 : index
    %c0_98 = arith.constant 0 : index
    %228 = vector.load %arg5[%c1_96, %c1_97, %c0_98] : memref<2x8x128xf32, #tpu.memory_space<vmem>>, vector<1x1x32xf32>
    %229 = vector.shape_cast %228 : vector<1x1x32xf32> to vector<1x32xf32>
    %230 = vector.broadcast %229 : vector<1x32xf32> to vector<16x32xf32>
    %231 = arith.addf %227, %230 : vector<16x32xf32>
    %232 = arith.addf %231, %179 : vector<16x32xf32>
    %c1_99 = arith.constant 1 : index
    %c2_100 = arith.constant 2 : index
    %c0_101 = arith.constant 0 : index
    %233 = vector.load %arg5[%c1_99, %c2_100, %c0_101] : memref<2x8x128xf32, #tpu.memory_space<vmem>>, vector<1x1x32xf32>
    %234 = vector.shape_cast %233 : vector<1x1x32xf32> to vector<1x32xf32>
    %c1_102 = arith.constant 1 : index
    %c3_103 = arith.constant 3 : index
    %c0_104 = arith.constant 0 : index
    %235 = vector.load %arg5[%c1_102, %c3_103, %c0_104] : memref<2x8x128xf32, #tpu.memory_space<vmem>>, vector<1x1x32xf32>
    %236 = vector.shape_cast %235 : vector<1x1x32xf32> to vector<1x32xf32>
    %cst_105 = arith.constant dense<0.000000e+00> : vector<16xf32>
    %237 = vector.multi_reduction <add>, %232, %cst_105 [1] : vector<16x32xf32> to vector<16xf32>
    %238 = vector.shape_cast %237 : vector<16xf32> to vector<16x1xf32>
    %cst_106 = arith.constant 3.200000e+01 : f32
    %239 = vector.broadcast %cst_106 : f32 to vector<16x1xf32>
    %240 = arith.divf %238, %239 : vector<16x1xf32>
    %241 = vector.broadcast %240 : vector<16x1xf32> to vector<16x32xf32>
    %242 = arith.subf %232, %241 : vector<16x32xf32>
    %243 = arith.mulf %242, %242 : vector<16x32xf32>
    %cst_107 = arith.constant dense<0.000000e+00> : vector<16xf32>
    %244 = vector.multi_reduction <add>, %243, %cst_107 [1] : vector<16x32xf32> to vector<16xf32>
    %245 = vector.shape_cast %244 : vector<16xf32> to vector<16x1xf32>
    %cst_108 = arith.constant 3.200000e+01 : f32
    %246 = vector.broadcast %cst_108 : f32 to vector<16x1xf32>
    %247 = arith.divf %245, %246 : vector<16x1xf32>
    %cst_109 = arith.constant 9.99999996E-13 : f32
    %248 = vector.broadcast %cst_109 : f32 to vector<16x1xf32>
    %249 = arith.addf %247, %248 : vector<16x1xf32>
    %250 = math.rsqrt %249 : vector<16x1xf32>
    %251 = vector.broadcast %250 : vector<16x1xf32> to vector<16x32xf32>
    %252 = arith.mulf %242, %251 : vector<16x32xf32>
    %253 = vector.broadcast %234 : vector<1x32xf32> to vector<16x32xf32>
    %254 = arith.mulf %252, %253 : vector<16x32xf32>
    %255 = vector.broadcast %236 : vector<1x32xf32> to vector<16x32xf32>
    %256 = arith.addf %254, %255 : vector<16x32xf32>
    %257 = arith.truncf %256 : vector<16x32xf32> to vector<16x32xbf16>
    %cst_110 = arith.constant dense<0.000000e+00> : vector<16x64xf32>
    %258 = tpu.matmul %257, %185, %cst_110 {dimension_numbers = #tpu.dot_dimension_numbers<[1], [0], [0], [1], [0, 0, 1, 1], [], []>} : vector<16x32xbf16>, vector<32x64xbf16>, vector<16x64xf32> -> vector<16x64xf32>
    %c1_111 = arith.constant 1 : index
    %c4_112 = arith.constant 4 : index
    %c0_113 = arith.constant 0 : index
    %259 = vector.load %arg5[%c1_111, %c4_112, %c0_113] : memref<2x8x128xf32, #tpu.memory_space<vmem>>, vector<1x1x64xf32>
    %260 = vector.shape_cast %259 : vector<1x1x64xf32> to vector<1x64xf32>
    %261 = vector.broadcast %260 : vector<1x64xf32> to vector<16x64xf32>
    %262 = arith.addf %258, %261 : vector<16x64xf32>
    %cst_114 = arith.constant 0.707106769 : f32
    %263 = vector.broadcast %cst_114 : f32 to vector<16x64xf32>
    %264 = arith.mulf %262, %263 : vector<16x64xf32>
    %265 = math.absf %264 : vector<16x64xf32>
    %cst_115 = arith.constant 0.327591091 : f32
    %266 = vector.broadcast %cst_115 : f32 to vector<16x64xf32>
    %267 = arith.mulf %266, %265 : vector<16x64xf32>
    %cst_116 = arith.constant 1.000000e+00 : f32
    %268 = vector.broadcast %cst_116 : f32 to vector<16x64xf32>
    %269 = arith.addf %268, %267 : vector<16x64xf32>
    %cst_117 = arith.constant 1.000000e+00 : f32
    %270 = vector.broadcast %cst_117 : f32 to vector<16x64xf32>
    %271 = arith.divf %270, %269 : vector<16x64xf32>
    %cst_118 = arith.constant 1.06140542 : f32
    %272 = vector.broadcast %cst_118 : f32 to vector<16x64xf32>
    %273 = arith.mulf %272, %271 : vector<16x64xf32>
    %cst_119 = arith.constant 1.45315206 : f32
    %274 = vector.broadcast %cst_119 : f32 to vector<16x64xf32>
    %275 = arith.subf %273, %274 : vector<16x64xf32>
    %276 = arith.mulf %275, %271 : vector<16x64xf32>
    %cst_120 = arith.constant 1.42141378 : f32
    %277 = vector.broadcast %cst_120 : f32 to vector<16x64xf32>
    %278 = arith.addf %276, %277 : vector<16x64xf32>
    %279 = arith.mulf %278, %271 : vector<16x64xf32>
    %cst_121 = arith.constant 0.284496725 : f32
    %280 = vector.broadcast %cst_121 : f32 to vector<16x64xf32>
    %281 = arith.subf %279, %280 : vector<16x64xf32>
    %282 = arith.mulf %281, %271 : vector<16x64xf32>
    %cst_122 = arith.constant 0.254829586 : f32
    %283 = vector.broadcast %cst_122 : f32 to vector<16x64xf32>
    %284 = arith.addf %282, %283 : vector<16x64xf32>
    %285 = arith.mulf %284, %271 : vector<16x64xf32>
    %cst_123 = arith.constant 0.000000e+00 : f32
    %286 = vector.broadcast %cst_123 : f32 to vector<16x64xf32>
    %287 = arith.subf %286, %265 : vector<16x64xf32>
    %288 = arith.mulf %287, %265 : vector<16x64xf32>
    %289 = math.exp %288 : vector<16x64xf32>
    %290 = arith.mulf %285, %289 : vector<16x64xf32>
    %cst_124 = arith.constant 1.000000e+00 : f32
    %291 = vector.broadcast %cst_124 : f32 to vector<16x64xf32>
    %292 = arith.subf %291, %290 : vector<16x64xf32>
    %cst_125 = arith.constant 0.000000e+00 : f32
    %293 = vector.broadcast %cst_125 : f32 to vector<16x64xf32>
    %294 = arith.cmpf oge, %264, %293 : vector<16x64xf32>
    %cst_126 = arith.constant 0.000000e+00 : f32
    %295 = vector.broadcast %cst_126 : f32 to vector<16x64xf32>
    %296 = arith.subf %295, %292 : vector<16x64xf32>
    %297 = arith.select %294, %292, %296 : vector<16x64xi1>, vector<16x64xf32>
    %cst_127 = arith.constant 5.000000e-01 : f32
    %298 = vector.broadcast %cst_127 : f32 to vector<16x64xf32>
    %299 = arith.mulf %298, %262 : vector<16x64xf32>
    %cst_128 = arith.constant 1.000000e+00 : f32
    %300 = vector.broadcast %cst_128 : f32 to vector<16x64xf32>
    %301 = arith.addf %300, %297 : vector<16x64xf32>
    %302 = arith.mulf %299, %301 : vector<16x64xf32>
    %303 = arith.truncf %302 : vector<16x64xf32> to vector<16x64xbf16>
    %cst_129 = arith.constant dense<0.000000e+00> : vector<16x32xf32>
    %304 = tpu.matmul %303, %187, %cst_129 {dimension_numbers = #tpu.dot_dimension_numbers<[1], [0], [0], [1], [0, 0, 1, 1], [], []>} : vector<16x64xbf16>, vector<64x32xbf16>, vector<16x32xf32> -> vector<16x32xf32>
    %c1_130 = arith.constant 1 : index
    %c5_131 = arith.constant 5 : index
    %c0_132 = arith.constant 0 : index
    %305 = vector.load %arg5[%c1_130, %c5_131, %c0_132] : memref<2x8x128xf32, #tpu.memory_space<vmem>>, vector<1x1x32xf32>
    %306 = vector.shape_cast %305 : vector<1x1x32xf32> to vector<1x32xf32>
    %307 = vector.broadcast %306 : vector<1x32xf32> to vector<16x32xf32>
    %308 = arith.addf %304, %307 : vector<16x32xf32>
    %309 = arith.addf %308, %256 : vector<16x32xf32>
    %c1_133 = arith.constant 1 : index
    %c6_134 = arith.constant 6 : index
    %c0_135 = arith.constant 0 : index
    %310 = vector.load %arg5[%c1_133, %c6_134, %c0_135] : memref<2x8x128xf32, #tpu.memory_space<vmem>>, vector<1x1x32xf32>
    %311 = vector.shape_cast %310 : vector<1x1x32xf32> to vector<1x32xf32>
    %c1_136 = arith.constant 1 : index
    %c7_137 = arith.constant 7 : index
    %c0_138 = arith.constant 0 : index
    %312 = vector.load %arg5[%c1_136, %c7_137, %c0_138] : memref<2x8x128xf32, #tpu.memory_space<vmem>>, vector<1x1x32xf32>
    %313 = vector.shape_cast %312 : vector<1x1x32xf32> to vector<1x32xf32>
    %cst_139 = arith.constant dense<0.000000e+00> : vector<16xf32>
    %314 = vector.multi_reduction <add>, %309, %cst_139 [1] : vector<16x32xf32> to vector<16xf32>
    %315 = vector.shape_cast %314 : vector<16xf32> to vector<16x1xf32>
    %cst_140 = arith.constant 3.200000e+01 : f32
    %316 = vector.broadcast %cst_140 : f32 to vector<16x1xf32>
    %317 = arith.divf %315, %316 : vector<16x1xf32>
    %318 = vector.broadcast %317 : vector<16x1xf32> to vector<16x32xf32>
    %319 = arith.subf %309, %318 : vector<16x32xf32>
    %320 = arith.mulf %319, %319 : vector<16x32xf32>
    %cst_141 = arith.constant dense<0.000000e+00> : vector<16xf32>
    %321 = vector.multi_reduction <add>, %320, %cst_141 [1] : vector<16x32xf32> to vector<16xf32>
    %322 = vector.shape_cast %321 : vector<16xf32> to vector<16x1xf32>
    %cst_142 = arith.constant 3.200000e+01 : f32
    %323 = vector.broadcast %cst_142 : f32 to vector<16x1xf32>
    %324 = arith.divf %322, %323 : vector<16x1xf32>
    %cst_143 = arith.constant 9.99999996E-13 : f32
    %325 = vector.broadcast %cst_143 : f32 to vector<16x1xf32>
    %326 = arith.addf %324, %325 : vector<16x1xf32>
    %327 = math.rsqrt %326 : vector<16x1xf32>
    %328 = vector.broadcast %327 : vector<16x1xf32> to vector<16x32xf32>
    %329 = arith.mulf %319, %328 : vector<16x32xf32>
    %330 = vector.broadcast %311 : vector<1x32xf32> to vector<16x32xf32>
    %331 = arith.mulf %329, %330 : vector<16x32xf32>
    %332 = vector.broadcast %313 : vector<1x32xf32> to vector<16x32xf32>
    %333 = arith.addf %331, %332 : vector<16x32xf32>
    %cst_144 = arith.constant dense<0.000000e+00> : vector<8x32xf32>
    %334 = tpu.matmul %2, %333, %cst_144 {dimension_numbers = #tpu.dot_dimension_numbers<[1], [0], [0], [1], [0, 0, 1, 1], [], []>} : vector<8x16xf32>, vector<16x32xf32>, vector<8x32xf32> -> vector<8x32xf32>
    %335 = vector.extract_strided_slice %334 {offsets = [0, 0], sizes = [2, 32], strides = [1, 1]} : vector<8x32xf32> to vector<2x32xf32>
    %336 = vector.extract_strided_slice %334 {offsets = [2, 0], sizes = [2, 32], strides = [1, 1]} : vector<8x32xf32> to vector<2x32xf32>
    %337 = tpu.concatenate %335, %336 in 1 : vector<2x32xf32>, vector<2x32xf32> -> vector<2x64xf32>
    %c0_145 = arith.constant 0 : index
    %c0_146 = arith.constant 0 : index
    %338 = vector.load %arg6[%c0_145, %c0_146] : memref<320x128xbf16, #tpu.memory_space<vmem>>, vector<64x32xbf16>
    %c64_147 = arith.constant 64 : index
    %c0_148 = arith.constant 0 : index
    %339 = vector.load %arg6[%c64_147, %c0_148] : memref<320x128xbf16, #tpu.memory_space<vmem>>, vector<64x32xbf16>
    %340 = arith.truncf %337 : vector<2x64xf32> to vector<2x64xbf16>
    %cst_149 = arith.constant dense<0.000000e+00> : vector<2x32xf32>
    %341 = tpu.matmul %340, %338, %cst_149 {dimension_numbers = #tpu.dot_dimension_numbers<[1], [0], [0], [1], [0, 0, 1, 1], [], []>} : vector<2x64xbf16>, vector<64x32xbf16>, vector<2x32xf32> -> vector<2x32xf32>
    %c2_150 = arith.constant 2 : index
    %c0_151 = arith.constant 0 : index
    %342 = vector.load %arg7[%c2_150, %c0_151] : memref<8x128xf32, #tpu.memory_space<vmem>>, vector<1x32xf32>
    %343 = vector.broadcast %342 : vector<1x32xf32> to vector<2x32xf32>
    %344 = arith.addf %341, %343 : vector<2x32xf32>
    %345 = arith.truncf %337 : vector<2x64xf32> to vector<2x64xbf16>
    %cst_152 = arith.constant dense<0.000000e+00> : vector<2x32xf32>
    %346 = tpu.matmul %345, %339, %cst_152 {dimension_numbers = #tpu.dot_dimension_numbers<[1], [0], [0], [1], [0, 0, 1, 1], [], []>} : vector<2x64xbf16>, vector<64x32xbf16>, vector<2x32xf32> -> vector<2x32xf32>
    %c3_153 = arith.constant 3 : index
    %c0_154 = arith.constant 0 : index
    %347 = vector.load %arg7[%c3_153, %c0_154] : memref<8x128xf32, #tpu.memory_space<vmem>>, vector<1x32xf32>
    %348 = vector.broadcast %347 : vector<1x32xf32> to vector<2x32xf32>
    %349 = arith.addf %346, %348 : vector<2x32xf32>
    %350 = tpu.iota {dimensions = array<i32: 0>} : vector<16x1xi32>
    %cst_155 = arith.constant 0.000000e+00 : f32
    %351 = vector.broadcast %cst_155 : f32 to vector<16x32xf32>
    %cst_156 = arith.constant 0.000000e+00 : f32
    %352 = vector.broadcast %cst_156 : f32 to vector<16x32xf32>
    %c0_i32 = arith.constant 0 : i32
    %353 = vector.broadcast %c0_i32 : i32 to vector<16x1xi32>
    %354 = arith.cmpi sge, %350, %353 : vector<16x1xi32>
    %c8_i32 = arith.constant 8 : i32
    %355 = vector.broadcast %c8_i32 : i32 to vector<16x1xi32>
    %356 = arith.cmpi slt, %350, %355 : vector<16x1xi32>
    %357 = arith.andi %354, %356 : vector<16x1xi1>
    %358 = arith.extui %357 : vector<16x1xi1> to vector<16x1xi32>
    %359 = arith.sitofp %358 : vector<16x1xi32> to vector<16x1xf32>
    %360 = vector.extract_strided_slice %344 {offsets = [0, 0], sizes = [1, 32], strides = [1, 1]} : vector<2x32xf32> to vector<1x32xf32>
    %361 = vector.broadcast %359 : vector<16x1xf32> to vector<16x32xf32>
    %362 = vector.broadcast %360 : vector<1x32xf32> to vector<16x32xf32>
    %363 = arith.mulf %361, %362 : vector<16x32xf32>
    %364 = arith.addf %351, %363 : vector<16x32xf32>
    %365 = vector.extract_strided_slice %349 {offsets = [0, 0], sizes = [1, 32], strides = [1, 1]} : vector<2x32xf32> to vector<1x32xf32>
    %366 = vector.broadcast %359 : vector<16x1xf32> to vector<16x32xf32>
    %367 = vector.broadcast %365 : vector<1x32xf32> to vector<16x32xf32>
    %368 = arith.mulf %366, %367 : vector<16x32xf32>
    %369 = arith.addf %352, %368 : vector<16x32xf32>
    %c8_i32_157 = arith.constant 8 : i32
    %370 = vector.broadcast %c8_i32_157 : i32 to vector<16x1xi32>
    %371 = arith.cmpi sge, %350, %370 : vector<16x1xi32>
    %c16_i32 = arith.constant 16 : i32
    %372 = vector.broadcast %c16_i32 : i32 to vector<16x1xi32>
    %373 = arith.cmpi slt, %350, %372 : vector<16x1xi32>
    %374 = arith.andi %371, %373 : vector<16x1xi1>
    %375 = arith.extui %374 : vector<16x1xi1> to vector<16x1xi32>
    %376 = arith.sitofp %375 : vector<16x1xi32> to vector<16x1xf32>
    %377 = vector.extract_strided_slice %344 {offsets = [1, 0], sizes = [1, 32], strides = [1, 1]} : vector<2x32xf32> to vector<1x32xf32>
    %378 = vector.broadcast %376 : vector<16x1xf32> to vector<16x32xf32>
    %379 = vector.broadcast %377 : vector<1x32xf32> to vector<16x32xf32>
    %380 = arith.mulf %378, %379 : vector<16x32xf32>
    %381 = arith.addf %364, %380 : vector<16x32xf32>
    %382 = vector.extract_strided_slice %349 {offsets = [1, 0], sizes = [1, 32], strides = [1, 1]} : vector<2x32xf32> to vector<1x32xf32>
    %383 = vector.broadcast %376 : vector<16x1xf32> to vector<16x32xf32>
    %384 = vector.broadcast %382 : vector<1x32xf32> to vector<16x32xf32>
    %385 = arith.mulf %383, %384 : vector<16x32xf32>
    %386 = arith.addf %369, %385 : vector<16x32xf32>
    %cst_158 = arith.constant dense<0.000000e+00> : vector<16xf32>
    %387 = vector.multi_reduction <add>, %333, %cst_158 [1] : vector<16x32xf32> to vector<16xf32>
    %388 = vector.shape_cast %387 : vector<16xf32> to vector<16x1xf32>
    %cst_159 = arith.constant 3.200000e+01 : f32
    %389 = vector.broadcast %cst_159 : f32 to vector<16x1xf32>
    %390 = arith.divf %388, %389 : vector<16x1xf32>
    %391 = vector.broadcast %390 : vector<16x1xf32> to vector<16x32xf32>
    %392 = arith.subf %333, %391 : vector<16x32xf32>
    %393 = arith.mulf %392, %392 : vector<16x32xf32>
    %cst_160 = arith.constant dense<0.000000e+00> : vector<16xf32>
    %394 = vector.multi_reduction <add>, %393, %cst_160 [1] : vector<16x32xf32> to vector<16xf32>
    %395 = vector.shape_cast %394 : vector<16xf32> to vector<16x1xf32>
    %cst_161 = arith.constant 3.200000e+01 : f32
    %396 = vector.broadcast %cst_161 : f32 to vector<16x1xf32>
    %397 = arith.divf %395, %396 : vector<16x1xf32>
    %cst_162 = arith.constant 9.99999996E-13 : f32
    %398 = vector.broadcast %cst_162 : f32 to vector<16x1xf32>
    %399 = arith.addf %397, %398 : vector<16x1xf32>
    %400 = math.rsqrt %399 : vector<16x1xf32>
    %401 = vector.broadcast %400 : vector<16x1xf32> to vector<16x32xf32>
    %402 = arith.mulf %392, %401 : vector<16x32xf32>
    %403 = arith.mulf %402, %381 : vector<16x32xf32>
    %404 = arith.addf %403, %386 : vector<16x32xf32>
    %c0_163 = arith.constant 0 : index
    %c0_164 = arith.constant 0 : index
    %405 = vector.load %arg2[%c0_163, %c0_164] : memref<16x32xf32, #tpu.memory_space<vmem>>, vector<16x32xf32>
    %406 = tpu.concatenate %404, %405 in 1 : vector<16x32xf32>, vector<16x32xf32> -> vector<16x64xf32>
    %c4_165 = arith.constant 4 : index
    %c0_166 = arith.constant 0 : index
    %407 = vector.load %arg7[%c4_165, %c0_166] : memref<8x128xf32, #tpu.memory_space<vmem>>, vector<1x64xf32>
    %c5_167 = arith.constant 5 : index
    %c0_168 = arith.constant 0 : index
    %408 = vector.load %arg7[%c5_167, %c0_168] : memref<8x128xf32, #tpu.memory_space<vmem>>, vector<1x64xf32>
    %cst_169 = arith.constant dense<0.000000e+00> : vector<16xf32>
    %409 = vector.multi_reduction <add>, %406, %cst_169 [1] : vector<16x64xf32> to vector<16xf32>
    %410 = vector.shape_cast %409 : vector<16xf32> to vector<16x1xf32>
    %cst_170 = arith.constant 6.400000e+01 : f32
    %411 = vector.broadcast %cst_170 : f32 to vector<16x1xf32>
    %412 = arith.divf %410, %411 : vector<16x1xf32>
    %413 = vector.broadcast %412 : vector<16x1xf32> to vector<16x64xf32>
    %414 = arith.subf %406, %413 : vector<16x64xf32>
    %415 = arith.mulf %414, %414 : vector<16x64xf32>
    %cst_171 = arith.constant dense<0.000000e+00> : vector<16xf32>
    %416 = vector.multi_reduction <add>, %415, %cst_171 [1] : vector<16x64xf32> to vector<16xf32>
    %417 = vector.shape_cast %416 : vector<16xf32> to vector<16x1xf32>
    %cst_172 = arith.constant 6.400000e+01 : f32
    %418 = vector.broadcast %cst_172 : f32 to vector<16x1xf32>
    %419 = arith.divf %417, %418 : vector<16x1xf32>
    %cst_173 = arith.constant 9.99999996E-13 : f32
    %420 = vector.broadcast %cst_173 : f32 to vector<16x1xf32>
    %421 = arith.addf %419, %420 : vector<16x1xf32>
    %422 = math.rsqrt %421 : vector<16x1xf32>
    %423 = vector.broadcast %422 : vector<16x1xf32> to vector<16x64xf32>
    %424 = arith.mulf %414, %423 : vector<16x64xf32>
    %425 = vector.broadcast %407 : vector<1x64xf32> to vector<16x64xf32>
    %426 = arith.mulf %424, %425 : vector<16x64xf32>
    %427 = vector.broadcast %408 : vector<1x64xf32> to vector<16x64xf32>
    %428 = arith.addf %426, %427 : vector<16x64xf32>
    %c128 = arith.constant 128 : index
    %c0_174 = arith.constant 0 : index
    %429 = vector.load %arg6[%c128, %c0_174] : memref<320x128xbf16, #tpu.memory_space<vmem>>, vector<64x128xbf16>
    %c192 = arith.constant 192 : index
    %c0_175 = arith.constant 0 : index
    %430 = vector.load %arg6[%c192, %c0_175] : memref<320x128xbf16, #tpu.memory_space<vmem>>, vector<128x128xbf16>
    %431 = arith.truncf %428 : vector<16x64xf32> to vector<16x64xbf16>
    %cst_176 = arith.constant dense<0.000000e+00> : vector<16x128xf32>
    %432 = tpu.matmul %431, %429, %cst_176 {dimension_numbers = #tpu.dot_dimension_numbers<[1], [0], [0], [1], [0, 0, 1, 1], [], []>} : vector<16x64xbf16>, vector<64x128xbf16>, vector<16x128xf32> -> vector<16x128xf32>
    %c6_177 = arith.constant 6 : index
    %c0_178 = arith.constant 0 : index
    %433 = vector.load %arg7[%c6_177, %c0_178] : memref<8x128xf32, #tpu.memory_space<vmem>>, vector<1x128xf32>
    %434 = vector.broadcast %433 : vector<1x128xf32> to vector<16x128xf32>
    %435 = arith.addf %432, %434 : vector<16x128xf32>
    %cst_179 = arith.constant 0.000000e+00 : f32
    %436 = vector.broadcast %cst_179 : f32 to vector<16x128xf32>
    %437 = arith.maximumf %435, %436 : vector<16x128xf32>
    %438 = arith.truncf %437 : vector<16x128xf32> to vector<16x128xbf16>
    %cst_180 = arith.constant dense<0.000000e+00> : vector<16x128xf32>
    %439 = tpu.matmul %438, %430, %cst_180 {dimension_numbers = #tpu.dot_dimension_numbers<[1], [0], [0], [1], [0, 0, 1, 1], [], []>} : vector<16x128xbf16>, vector<128x128xbf16>, vector<16x128xf32> -> vector<16x128xf32>
    %c7_181 = arith.constant 7 : index
    %c0_182 = arith.constant 0 : index
    %440 = vector.load %arg7[%c7_181, %c0_182] : memref<8x128xf32, #tpu.memory_space<vmem>>, vector<1x128xf32>
    %441 = vector.broadcast %440 : vector<1x128xf32> to vector<16x128xf32>
    %442 = arith.addf %439, %441 : vector<16x128xf32>
    %443 = arith.negf %442 : vector<16x128xf32>
    %444 = math.exp %443 : vector<16x128xf32>
    %cst_183 = arith.constant 1.000000e+00 : f32
    %445 = vector.broadcast %cst_183 : f32 to vector<16x128xf32>
    %446 = arith.addf %445, %444 : vector<16x128xf32>
    %447 = arith.divf %445, %446 : vector<16x128xf32>
    %c0_184 = arith.constant 0 : index
    %c0_185 = arith.constant 0 : index
    %448 = vector.load %arg8[%c0_184, %c0_185] : memref<16x128xf32, #tpu.memory_space<vmem>>, vector<16x128xf32>
    tpu.vector_store %arg8[%c0_184, %c0_185], %447 {strides = array<i32>} : memref<16x128xf32, #tpu.memory_space<vmem>>, vector<16x128xf32>,
    return
  }
  func.func @transform_0(%arg0: i32) -> (i32, i32) {
    %c0_i32 = arith.constant 0 : i32
    %c0_i32_0 = arith.constant 0 : i32
    %c0_i32_1 = arith.constant 0 : i32
    return %c0_i32, %c0_i32_0 : i32, i32
  }
  func.func @transform_1(%arg0: i32) -> (i32, i32) {
    %c0_i32 = arith.constant 0 : i32
    %c0_i32_0 = arith.constant 0 : i32
    %c0_i32_1 = arith.constant 0 : i32
    return %c0_i32, %c0_i32_0 : i32, i32
  }
  func.func @transform_2(%arg0: i32) -> (i32, i32) {
    %c0_i32 = arith.constant 0 : i32
    %c0_i32_0 = arith.constant 0 : i32
    %c0_i32_1 = arith.constant 0 : i32
    return %c0_i32, %c0_i32_0 : i32, i32
  }
  func.func @transform_3(%arg0: i32) -> (i32, i32, i32) {
    %c0_i32 = arith.constant 0 : i32
    %c0_i32_0 = arith.constant 0 : i32
    %c0_i32_1 = arith.constant 0 : i32
    %c0_i32_2 = arith.constant 0 : i32
    return %c0_i32, %c0_i32_0, %c0_i32_1 : i32, i32, i32
  }
  func.func @transform_4(%arg0: i32) -> (i32, i32, i32) {
    %c0_i32 = arith.constant 0 : i32
    %c0_i32_0 = arith.constant 0 : i32
    %c0_i32_1 = arith.constant 0 : i32
    %c0_i32_2 = arith.constant 0 : i32
    return %c0_i32, %c0_i32_0, %c0_i32_1 : i32, i32, i32
  }
  func.func @transform_5(%arg0: i32) -> (i32, i32) {
    %c0_i32 = arith.constant 0 : i32
    %c0_i32_0 = arith.constant 0 : i32
    %c0_i32_1 = arith.constant 0 : i32
    return %c0_i32, %c0_i32_0 : i32, i32
  }
  func.func @transform_6(%arg0: i32) -> (i32, i32) {
    %c0_i32 = arith.constant 0 : i32
    %c0_i32_0 = arith.constant 0 : i32
    %c0_i32_1 = arith.constant 0 : i32
    return %c0_i32, %c0_i32_0 : i32, i32
  }
  func.func @transform_7(%arg0: i32) -> (i32, i32) {
    %c0_i32 = arith.constant 0 : i32
    %c0_i32_0 = arith.constant 0 : i32
    %c0_i32_1 = arith.constant 0 : i32
    return %c0_i32, %c0_i32_0 : i32, i32
  }
}

</mosaic_0001>

<llo_original>
// kernel: trigger_forward_pallas.1
$region0: #{trigger_forward_pallas.1}
  #allocation0 [shape = 'u32[]', space=smem, size = 0x4, offset = 0x4, fixed_abs, tag = 'smem constant byte address 0x4 - core index']
  #allocation1 [shape = 'u32[72,128]{1,0:T(1,128)}', space=vmem, size = 0x9000, scoped, tag = 'internal scratch']
  %s0 = inlined_call_operand.vmem [shape: f32[16,32], index: 0, kind: input, shape index: {}]
  %s1 = inlined_call_operand.vmem [shape: f32[16,32], index: 1, kind: input, shape index: {}]
  %s2 = inlined_call_operand.vmem [shape: f32[64,64], index: 2, kind: input, shape index: {}]
  %s3 = inlined_call_operand.vmem [shape: bf16[2,128,128], index: 3, kind: input, shape index: {}]
  %s4 = inlined_call_operand.vmem [shape: f32[2,8,128], index: 4, kind: input, shape index: {}]
  %s5 = inlined_call_operand.vmem [shape: bf16[320,128], index: 5, kind: input, shape index: {}]
  %s6 = inlined_call_operand.vmem [shape: f32[8,128], index: 6, kind: input, shape index: {}]
  %s7 = inlined_call_operand.vmem [shape: f32[16,128], index: 7, kind: output, shape index: {}]
  %s8 = sld [smem:[#allocation0]]
  $region38: #{trigger_forward_pallas.1} parent=0
    _
  %s10 = ssub.s32 1, %s8
  %s11 = scalar_select 0, %s10, %s8
  // Predicated region
  $region2: #{trigger_forward_pallas.1} parent=0 // pred_check
    _
  $region3: #{trigger_forward_pallas.1} parent=0 // pred_check_branch
    %13 = sbr.rel (0) target = $region5
  $region4: #{trigger_forward_pallas.1} parent=0 // pred_region
    _
  $region5: #{trigger_forward_pallas.1} parent=0 // pred_fallthru
    _
  // Predicated region
  $region6: #{trigger_forward_pallas.1} parent=0 // pred_check
    _
  $region7: #{trigger_forward_pallas.1} parent=0 // pred_check_branch
    %15 = sbr.rel (0) target = $region9
  $region8: #{trigger_forward_pallas.1} parent=0 // pred_region
    _
  $region9: #{trigger_forward_pallas.1} parent=0 // pred_fallthru
    _
  // Predicated region
  $region10: #{trigger_forward_pallas.1} parent=0 // pred_check
    _
  $region11: #{trigger_forward_pallas.1} parent=0 // pred_check_branch
    %17 = sbr.rel (0) target = $region13
  $region12: #{trigger_forward_pallas.1} parent=0 // pred_region
    _
  $region13: #{trigger_forward_pallas.1} parent=0 // pred_fallthru
    _
  // Predicated region
  $region14: #{trigger_forward_pallas.1} parent=0 // pred_check
    _
  $region15: #{trigger_forward_pallas.1} parent=0 // pred_check_branch
    %19 = sbr.rel (0) target = $region17
  $region16: #{trigger_forward_pallas.1} parent=0 // pred_region
    _
  $region17: #{trigger_forward_pallas.1} parent=0 // pred_fallthru
    _
  // Predicated region
  $region18: #{trigger_forward_pallas.1} parent=0 // pred_check
    _
  $region19: #{trigger_forward_pallas.1} parent=0 // pred_check_branch
    %21 = sbr.rel (0) target = $region21
  $region20: #{trigger_forward_pallas.1} parent=0 // pred_region
    _
  $region21: #{trigger_forward_pallas.1} parent=0 // pred_fallthru
    _
  // Predicated region
  $region22: #{trigger_forward_pallas.1} parent=0 // pred_check
    _
  $region23: #{trigger_forward_pallas.1} parent=0 // pred_check_branch
    %23 = sbr.rel (0) target = $region25
  $region24: #{trigger_forward_pallas.1} parent=0 // pred_region
    _
  $region25: #{trigger_forward_pallas.1} parent=0 // pred_fallthru
    _
  // Predicated region
  $region26: #{trigger_forward_pallas.1} parent=0 // pred_check
    _
  $region27: #{trigger_forward_pallas.1} parent=0 // pred_check_branch
    %25 = sbr.rel (0) target = $region29
  $region28: #{trigger_forward_pallas.1} parent=0 // pred_region
    _
  $region29: #{trigger_forward_pallas.1} parent=0 // pred_fallthru
    _
  %v27 = vld [vmem:[%s2] sm:$0xff]
  %v28 = vld [vmem:[%s2 + $0x8] sm:$0xff]
  %v29 = vld [vmem:[%s2 + $0x10] sm:$0xff]
  %v30 = vld [vmem:[%s2 + $0x18] sm:$0xff]
  %v31 = vld [vmem:[%s2 + $0x20] sm:$0xff]
  %v32 = vld [vmem:[%s2 + $0x28] sm:$0xff]
  %v33 = vld [vmem:[%s2 + $0x30] sm:$0xff]
  %v34 = vld [vmem:[%s2 + $0x38] sm:$0xff]
  %v35 = vld [vmem:[%s0] sm:$0xff]
  %v36 = vld [vmem:[%s0 + $0x8] sm:$0xff]
  %v37 = vld [vmem:[%s6] sm:$0x1]
  %v38 = vld [vmem:[%s6 + $0x1] sm:$0x1]
  %vm39 = vcmask 261120
  %v40 = vsel %vm39, %v35, 0.0
  %41 = vadd.xlane.f32.xlu0 %v40
  %v42 = vpop.xlane.xlu0 %41
  %v43 = vsel %vm39, %v36, 0.0
  %44 = vadd.xlane.f32.xlu0 %v43
  %v45 = vpop.xlane.xlu0 %44
  %v46 = vrcp.pop 32.0
  %v47 = vmul.f32 32.0, %v46
  %v48 = vsub.f32 1.0, %v47
  %v49 = vmul.f32 %v46, %v48
  %v50 = vadd.f32 %v46, %v49
  %vm51 = vweird.f32 %v46
  %v52 = vsel %vm51, %v46, %v50
  %v53 = vmul.f32 %v42, %v52
  %v54 = vmul.f32 %v45, %v52
  %v55 = vsub.f32 %v35, %v53
  %v56 = vsub.f32 %v36, %v54
  %v57 = vmul.f32 %v55, %v55
  %v58 = vmul.f32 %v56, %v56
  %v59 = vsel %vm39, %v57, 0.0
  %60 = vadd.xlane.f32.xlu0 %v59
  %v61 = vpop.xlane.xlu0 %60
  %v62 = vsel %vm39, %v58, 0.0
  %63 = vadd.xlane.f32.xlu0 %v62
  %v64 = vpop.xlane.xlu0 %63
  %v65 = vmul.f32 %v61, %v52
  %v66 = vmul.f32 %v64, %v52
  %v67 = vadd.f32 %v65, 1e-12
  %v68 = vadd.f32 %v66, 1e-12
  %v69 = vrsqrt.pop %v67
  %v70 = vmul.f32 %v69, %v67
  %v71 = vmul.f32 %v70, %v69
  %v72 = vmul.f32 0.5, %v71
  %v73 = vsub.f32 1.5, %v72
  %v74 = vmul.f32 %v69, %v73
  %vm75 = vweird.f32 %v67
  %vm76 = vweird.f32 %v69
  %vm77 = vmor %vm75, %vm76
  %v78 = vsel %vm77, %v69, %v74
  %v79 = vrsqrt.pop %v68
  %v80 = vmul.f32 %v79, %v68
  %v81 = vmul.f32 %v80, %v79
  %v82 = vmul.f32 0.5, %v81
  %v83 = vsub.f32 1.5, %v82
  %v84 = vmul.f32 %v79, %v83
  %vm85 = vweird.f32 %v68
  %vm86 = vweird.f32 %v79
  %vm87 = vmor %vm85, %vm86
  %v88 = vsel %vm87, %v79, %v84
  %v89 = vmul.f32 %v55, %v78
  %v90 = vmul.f32 %v56, %v88
  %v91 = vperm.slane %v37, 0
  %v92 = vmul.f32 %v89, %v91
  %v93 = vmul.f32 %v90, %v91
  %v94 = vperm.slane %v38, 0
  %v95 = vadd.f32 %v92, %v94
  %v96 = vadd.f32 %v93, %v94
  %v97 = vld [vmem:[%s3] sm:$0xf]
  %v98 = vld [vmem:[%s3 + $0x4] sm:$0xf]
  %v99 = vld [vmem:[%s3 + $0x8] sm:$0xf]
  %v100 = vld [vmem:[%s3 + $0xc] sm:$0xf]
  %v101 = vld [vmem:[%s3 + $0x10] sm:$0xf]
  %v102 = vld [vmem:[%s3 + $0x14] sm:$0xf]
  %v103 = vld [vmem:[%s3 + $0x18] sm:$0xf]
  %v104 = vld [vmem:[%s3 + $0x1c] sm:$0xf]
  %v105 = vld [vmem:[%s3 + $0x20] sm:$0xf]
  %v106 = vld [vmem:[%s3 + $0x24] sm:$0xf]
  %v107 = vld [vmem:[%s3 + $0x28] sm:$0xf]
  %v108 = vld [vmem:[%s3 + $0x2c] sm:$0xf]
  %v109 = vld [vmem:[%s3 + $0x30] sm:$0xf]
  %v110 = vld [vmem:[%s3 + $0x34] sm:$0xf]
  %v111 = vld [vmem:[%s3 + $0x38] sm:$0xf]
  %v112 = vld [vmem:[%s3 + $0x3c] sm:$0xf]
  %v113 = vpack.c.bf16 %v96, %v95
  %v114 = vld [vmem:[%s4] sm:$0x1]
  %v115 = vperm.slane %v114, 0
  %v120 = vunpack.c.l.b16 %v97
  %v121 = vunpack.c.l.b16 %v98
  %v122 = vunpack.c.l.b16 %v99
  %v123 = vunpack.c.l.b16 %v100
  %v124 = vpack.c.b16 %v121, %v120
  %v125 = vpack.c.b16 %v123, %v122
  %v129 = vsel %vm39, %v113, 0
  %131 = vmatpush.bf16.msra.mxu0 0
  %132 = vmatpush.bf16.msra.mxu0 0
  %133 = vmatpush.bf16.msra.mxu0 0
  %134 = vmatpush.bf16.msra.mxu0 0
  %135 = vmatpush.bf16.msra.mxu0 0
  %136 = vmatpush.bf16.msra.mxu0 0
  %137 = vmatpush.bf16.msra.mxu0 %v125
  %138 = vmatpush.bf16.msra.mxu0 %v124
  %139 = vmatmul.bf16.gmra.mxu0 %v129
  %v140 = vpop.f32.mrf.mxu0
  %v141 = vadd.f32 %v115, %v140
  %v142 = vpop.f32.mrf.mxu0
  %v143 = vadd.f32 %v115, %v142
  %144 = vdwg.mxu0
  %v145 = vmul.f32 %v141, 0.35355338
  %v146 = vmul.f32 %v143, 0.35355338
  %v147 = vmul.f32 %v145, %v27
  %v148 = vmul.f32 %v146, %v28
  %v149 = vmul.f32 %v145, %v29
  %v150 = vmul.f32 %v146, %v30
  %v151 = vmul.f32 %v145, %v31
  %v152 = vmul.f32 %v146, %v32
  %v153 = vmul.f32 %v145, %v33
  %v154 = vmul.f32 %v146, %v34
  %v155 = vpack.c.bf16 %v148, %v147
  %v156 = vpack.c.bf16 %v150, %v149
  %v157 = vpack.c.bf16 %v152, %v151
  %v158 = vpack.c.bf16 %v154, %v153
  %v159 = vpack.c.bf16 %v143, %v141
  %161 = vrot.lane.b32.xlu0 %v159, 96
  %v162 = vpop.permute.xlu0 %161
  %171 = vrot.lane.b32.xlu0 %v27, 96
  %v172 = vpop.permute.xlu0 %171
  %173 = vrot.lane.b32.xlu0 %v28, 96
  %v174 = vpop.permute.xlu0 %173
  %175 = vrot.lane.b32.xlu0 %v29, 96
  %v176 = vpop.permute.xlu0 %175
  %177 = vrot.lane.b32.xlu0 %v30, 96
  %v178 = vpop.permute.xlu0 %177
  %179 = vrot.lane.b32.xlu0 %v31, 96
  %v180 = vpop.permute.xlu0 %179
  %181 = vrot.lane.b32.xlu0 %v32, 96
  %v182 = vpop.permute.xlu0 %181
  %183 = vrot.lane.b32.xlu0 %v33, 96
  %v184 = vpop.permute.xlu0 %183
  %185 = vrot.lane.b32.xlu0 %v34, 96
  %v186 = vpop.permute.xlu0 %185
  %v196 = vsel %vm39, %v155, 0
  %v199 = vsel %vm39, %v156, 0
  %v202 = vsel %vm39, %v157, 0
  %v205 = vsel %vm39, %v158, 0
  %v208 = vsel %vm39, %v162, 0
  %210 = vmatpush.bf16.xpose.msra.mxu0 0
  %211 = vmatpush.bf16.xpose.msra.mxu0 0
  %212 = vmatpush.bf16.xpose.msra.mxu0 0
  %213 = vmatpush.bf16.xpose.msra.mxu0 0
  %214 = vmatpush.bf16.xpose.msra.mxu0 0
  %215 = vmatpush.bf16.xpose.msra.mxu0 0
  %216 = vmatpush.bf16.xpose.msra.mxu0 0
  %217 = vmatpush.bf16.xpose.msra.mxu0 %v208
  %218 = vmatmul.bf16.gmra.mxu0 %v196
  %v219 = vpop.f32.mrf.mxu0
  %v220 = vadd.f32 %v172, %v219
  %v221 = vpop.f32.mrf.mxu0
  %v222 = vadd.f32 %v174, %v221
  %223 = vmatmul.bf16.gmra.mxu0 %v199
  %v224 = vpop.f32.mrf.mxu0
  %v225 = vadd.f32 %v176, %v224
  %v226 = vpop.f32.mrf.mxu0
  %v227 = vadd.f32 %v178, %v226
  %228 = vmatmul.bf16.gmra.mxu0 %v202
  %v229 = vpop.f32.mrf.mxu0
  %v230 = vadd.f32 %v180, %v229
  %v231 = vpop.f32.mrf.mxu0
  %v232 = vadd.f32 %v182, %v231
  %233 = vmatmul.bf16.gmra.mxu0 %v205
  %v234 = vpop.f32.mrf.mxu0
  %v235 = vadd.f32 %v184, %v234
  %v236 = vpop.f32.mrf.mxu0
  %v237 = vadd.f32 %v186, %v236
  %238 = vdwg.mxu0
  %vm239 = vcmask 130048
  %v240 = vsel %vm239, %v220, -inf
  %241 = vmax.xlane.f32.xlu0 %v240
  %v242 = vpop.xlane.xlu0 %241
  %v243 = vsel %vm239, %v222, -inf
  %244 = vmax.xlane.f32.xlu0 %v243
  %v245 = vpop.xlane.xlu0 %244
  %v246 = vsel %vm239, %v225, -inf
  %247 = vmax.xlane.f32.xlu0 %v246
  %v248 = vpop.xlane.xlu0 %247
  %v249 = vsel %vm239, %v227, -inf
  %250 = vmax.xlane.f32.xlu0 %v249
  %v251 = vpop.xlane.xlu0 %250
  %v252 = vsel %vm239, %v230, -inf
  %253 = vmax.xlane.f32.xlu0 %v252
  %v254 = vpop.xlane.xlu0 %253
  %v255 = vsel %vm239, %v232, -inf
  %256 = vmax.xlane.f32.xlu0 %v255
  %v257 = vpop.xlane.xlu0 %256
  %v258 = vsel %vm239, %v235, -inf
  %259 = vmax.xlane.f32.xlu0 %v258
  %v260 = vpop.xlane.xlu0 %259
  %v261 = vsel %vm239, %v237, -inf
  %262 = vmax.xlane.f32.xlu0 %v261
  %v263 = vpop.xlane.xlu0 %262
  %v264 = vsub.f32 %v220, %v242
  %v265 = vsub.f32 %v222, %v245
  %v266 = vsub.f32 %v225, %v248
  %v267 = vsub.f32 %v227, %v251
  %v268 = vsub.f32 %v230, %v254
  %v269 = vsub.f32 %v232, %v257
  %v270 = vsub.f32 %v235, %v260
  %v271 = vsub.f32 %v237, %v263
  %v272 = vmul.f32 %v264, 1.442695
  %v273 = vpow.pop %v272
  %v274 = vmul.f32 %v265, 1.442695
  %v275 = vpow.pop %v274
  %v276 = vmul.f32 %v266, 1.442695
  %v277 = vpow.pop %v276
  %v278 = vmul.f32 %v267, 1.442695
  %v279 = vpow.pop %v278
  %v280 = vmul.f32 %v268, 1.442695
  %v281 = vpow.pop %v280
  %v282 = vmul.f32 %v269, 1.442695
  %v283 = vpow.pop %v282
  %v284 = vmul.f32 %v270, 1.442695
  %v285 = vpow.pop %v284
  %v286 = vmul.f32 %v271, 1.442695
  %v287 = vpow.pop %v286
  %v288 = vsel %vm239, %v273, 0.0
  %289 = vadd.xlane.f32.xlu0 %v288
  %v290 = vpop.xlane.xlu0 %289
  %v291 = vsel %vm239, %v275, 0.0
  %292 = vadd.xlane.f32.xlu0 %v291
  %v293 = vpop.xlane.xlu0 %292
  %v294 = vsel %vm239, %v277, 0.0
  %295 = vadd.xlane.f32.xlu0 %v294
  %v296 = vpop.xlane.xlu0 %295
  %v297 = vsel %vm239, %v279, 0.0
  %298 = vadd.xlane.f32.xlu0 %v297
  %v299 = vpop.xlane.xlu0 %298
  %v300 = vsel %vm239, %v281, 0.0
  %301 = vadd.xlane.f32.xlu0 %v300
  %v302 = vpop.xlane.xlu0 %301
  %v303 = vsel %vm239, %v283, 0.0
  %304 = vadd.xlane.f32.xlu0 %v303
  %v305 = vpop.xlane.xlu0 %304
  %v306 = vsel %vm239, %v285, 0.0
  %307 = vadd.xlane.f32.xlu0 %v306
  %v308 = vpop.xlane.xlu0 %307
  %v309 = vsel %vm239, %v287, 0.0
  %310 = vadd.xlane.f32.xlu0 %v309
  %v311 = vpop.xlane.xlu0 %310
  %v312 = vrcp.pop %v290
  %v313 = vrcp.pop %v293
  %v314 = vrcp.pop %v296
  %v315 = vrcp.pop %v299
  %v316 = vrcp.pop %v302
  %v317 = vrcp.pop %v305
  %v318 = vrcp.pop %v308
  %v319 = vrcp.pop %v311
  %v320 = vmul.f32 %v273, %v312
  %v321 = vmul.f32 %v275, %v313
  %v322 = vmul.f32 %v277, %v314
  %v323 = vmul.f32 %v279, %v315
  %v324 = vmul.f32 %v281, %v316
  %v325 = vmul.f32 %v283, %v317
  %v326 = vmul.f32 %v285, %v318
  %v327 = vmul.f32 %v287, %v319
  %v328 = vpack.c.bf16 %v321, %v320
  %v329 = vpack.c.bf16 %v323, %v322
  %v330 = vpack.c.bf16 %v325, %v324
  %v331 = vpack.c.bf16 %v327, %v326
  %332 = vrot.lane.b32.xlu0 %v159, 64
  %v333 = vpop.permute.xlu0 %332
  %v336 = vsel %vm239, %v328, 0
  %v339 = vsel %vm239, %v329, 0
  %v342 = vsel %vm239, %v330, 0
  %v345 = vsel %vm239, %v331, 0
  %347 = vmatpush.bf16.msra.mxu0 0
  %348 = vmatpush.bf16.msra.mxu0 0
  %349 = vmatpush.bf16.msra.mxu0 0
  %350 = vmatpush.bf16.msra.mxu0 0
  %351 = vmatpush.bf16.msra.mxu0 0
  %352 = vmatpush.bf16.msra.mxu0 0
  %353 = vmatpush.bf16.msra.mxu0 0
  %354 = vmatpush.bf16.msra.mxu0 %v333
  %355 = vmatmul.bf16.gmra.mxu0 %v336
  %v356 = vpop.f32.mrf.mxu0
  %v357 = vadd.f32 0.0, %v356
  %v358 = vpop.f32.mrf.mxu0
  %v359 = vadd.f32 0.0, %v358
  %360 = vmatmul.bf16.gmra.mxu0 %v339
  %v361 = vpop.f32.mrf.mxu0
  %v362 = vadd.f32 0.0, %v361
  %v363 = vpop.f32.mrf.mxu0
  %v364 = vadd.f32 0.0, %v363
  %365 = vmatmul.bf16.gmra.mxu0 %v342
  %v366 = vpop.f32.mrf.mxu0
  %v367 = vadd.f32 0.0, %v366
  %v368 = vpop.f32.mrf.mxu0
  %v369 = vadd.f32 0.0, %v368
  %370 = vmatmul.bf16.gmra.mxu0 %v345
  %v371 = vpop.f32.mrf.mxu0
  %v372 = vadd.f32 0.0, %v371
  %v373 = vpop.f32.mrf.mxu0
  %v374 = vadd.f32 0.0, %v373
  %375 = vdwg.mxu0
  %v376 = vmul.f32 %v357, %v27
  %v377 = vmul.f32 %v359, %v28
  %v378 = vmul.f32 %v362, %v29
  %v379 = vmul.f32 %v364, %v30
  %v380 = vmul.f32 %v367, %v31
  %v381 = vmul.f32 %v369, %v32
  %v382 = vmul.f32 %v372, %v33
  %v383 = vmul.f32 %v374, %v34
  %v384 = vadd.f32 %v376, %v378
  %v385 = vadd.f32 %v377, %v379
  %v386 = vadd.f32 %v384, %v380
  %v387 = vadd.f32 %v385, %v381
  %v388 = vadd.f32 %v386, %v382
  %v389 = vadd.f32 %v387, %v383
  %v390 = vpack.c.bf16 %v389, %v388
  %v391 = vld [vmem:[%s4 + $0x1] sm:$0x1]
  %v392 = vperm.slane %v391, 0
  %393 = vrot.lane.b32.xlu0 %v124, 32
  %v394 = vpop.permute.xlu0 %393
  %395 = vrot.lane.b32.xlu0 %v125, 32
  %v396 = vpop.permute.xlu0 %395
  %v400 = vsel %vm39, %v390, 0
  %402 = vmatpush.bf16.msra.mxu0 0
  %403 = vmatpush.bf16.msra.mxu0 0
  %404 = vmatpush.bf16.msra.mxu0 0
  %405 = vmatpush.bf16.msra.mxu0 0
  %406 = vmatpush.bf16.msra.mxu0 0
  %407 = vmatpush.bf16.msra.mxu0 0
  %408 = vmatpush.bf16.msra.mxu0 %v396
  %409 = vmatpush.bf16.msra.mxu0 %v394
  %410 = vmatmul.bf16.gmra.mxu0 %v400
  %v411 = vpop.f32.mrf.mxu0
  %v412 = vadd.f32 %v392, %v411
  %v413 = vpop.f32.mrf.mxu0
  %v414 = vadd.f32 %v392, %v413
  %415 = vdwg.mxu0
  %v416 = vadd.f32 %v412, %v95
  %v417 = vadd.f32 %v414, %v96
  %v418 = vld [vmem:[%s4 + $0x2] sm:$0x1]
  %v419 = vld [vmem:[%s4 + $0x3] sm:$0x1]
  %v420 = vsel %vm39, %v416, 0.0
  %421 = vadd.xlane.f32.xlu0 %v420
  %v422 = vpop.xlane.xlu0 %421
  %v423 = vsel %vm39, %v417, 0.0
  %424 = vadd.xlane.f32.xlu0 %v423
  %v425 = vpop.xlane.xlu0 %424
  %v426 = vmul.f32 %v422, %v52
  %v427 = vmul.f32 %v425, %v52
  %v428 = vsub.f32 %v416, %v426
  %v429 = vsub.f32 %v417, %v427
  %v430 = vmul.f32 %v428, %v428
  %v431 = vmul.f32 %v429, %v429
  %v432 = vsel %vm39, %v430, 0.0
  %433 = vadd.xlane.f32.xlu0 %v432
  %v434 = vpop.xlane.xlu0 %433
  %v435 = vsel %vm39, %v431, 0.0
  %436 = vadd.xlane.f32.xlu0 %v435
  %v437 = vpop.xlane.xlu0 %436
  %v438 = vmul.f32 %v434, %v52
  %v439 = vmul.f32 %v437, %v52
  %v440 = vadd.f32 %v438, 1e-12
  %v441 = vadd.f32 %v439, 1e-12
  %v442 = vrsqrt.pop %v440
  %v443 = vmul.f32 %v442, %v440
  %v444 = vmul.f32 %v443, %v442
  %v445 = vmul.f32 0.5, %v444
  %v446 = vsub.f32 1.5, %v445
  %v447 = vmul.f32 %v442, %v446
  %vm448 = vweird.f32 %v440
  %vm449 = vweird.f32 %v442
  %vm450 = vmor %vm448, %vm449
  %v451 = vsel %vm450, %v442, %v447
  %v452 = vrsqrt.pop %v441
  %v453 = vmul.f32 %v452, %v441
  %v454 = vmul.f32 %v453, %v452
  %v455 = vmul.f32 0.5, %v454
  %v456 = vsub.f32 1.5, %v455
  %v457 = vmul.f32 %v452, %v456
  %vm458 = vweird.f32 %v441
  %vm459 = vweird.f32 %v452
  %vm460 = vmor %vm458, %vm459
  %v461 = vsel %vm460, %v452, %v457
  %v462 = vmul.f32 %v428, %v451
  %v463 = vmul.f32 %v429, %v461
  %v464 = vperm.slane %v418, 0
  %v465 = vmul.f32 %v462, %v464
  %v466 = vmul.f32 %v463, %v464
  %v467 = vperm.slane %v419, 0
  %v468 = vadd.f32 %v465, %v467
  %v469 = vadd.f32 %v466, %v467
  %v470 = vpack.c.bf16 %v469, %v468
  %v471 = vld [vmem:[%s4 + $0x4] sm:$0x1]
  %v472 = vperm.slane %v471, 0
  %v477 = vunpack.c.l.b16 %v101
  %v478 = vunpack.c.l.b16 %v102
  %v479 = vunpack.c.l.b16 %v103
  %v480 = vunpack.c.l.b16 %v104
  %v481 = vpack.c.b16 %v478, %v477
  %v482 = vpack.c.b16 %v480, %v479
  %v486 = vsel %vm39, %v470, 0
  %488 = vmatpush.bf16.msra.mxu0 0
  %489 = vmatpush.bf16.msra.mxu0 0
  %490 = vmatpush.bf16.msra.mxu0 0
  %491 = vmatpush.bf16.msra.mxu0 0
  %492 = vmatpush.bf16.msra.mxu0 0
  %493 = vmatpush.bf16.msra.mxu0 0
  %494 = vmatpush.bf16.msra.mxu0 %v482
  %495 = vmatpush.bf16.msra.mxu0 %v481
  %496 = vmatmul.bf16.gmra.mxu0 %v486
  %v497 = vpop.f32.mrf.mxu0
  %v498 = vadd.f32 %v472, %v497
  %v499 = vpop.f32.mrf.mxu0
  %v500 = vadd.f32 %v472, %v499
  %501 = vdwg.mxu0
  %v502 = vmul.f32 %v498, 0.70710677
  %v503 = vmul.f32 %v500, 0.70710677
  %v504 = vand.u32 2147483647, %v502
  %v505 = vand.u32 2147483647, %v503
  %v506 = vmul.f32 %v504, 0.3275911
  %v507 = vmul.f32 %v505, 0.3275911
  %v508 = vadd.f32 %v506, 1.0
  %v509 = vadd.f32 %v507, 1.0
  %v510 = vrcp.pop %v508
  %v511 = vmul.f32 %v508, %v510
  %v512 = vsub.f32 1.0, %v511
  %v513 = vmul.f32 %v510, %v512
  %v514 = vadd.f32 %v510, %v513
  %vm515 = vweird.f32 %v508
  %vm516 = vweird.f32 %v510
  %vm517 = vmor %vm515, %vm516
  %v518 = vsel %vm517, %v510, %v514
  %v519 = vand.u32 2147483647, %v508
  %vm520 = vcmp.eq.f32.partialorder %v519, 8.507059e+37
  %v521 = vand.u32 %v508, 2147483648
  %v522 = vor.u32 1.1754944e-38, %v521
  %v523 = vsel %vm520, %v522, %v518
  %v524 = vmul.f32 1.0, %v523
  %v525 = vrcp.pop %v509
  %v526 = vmul.f32 %v509, %v525
  %v527 = vsub.f32 1.0, %v526
  %v528 = vmul.f32 %v525, %v527
  %v529 = vadd.f32 %v525, %v528
  %vm530 = vweird.f32 %v509
  %vm531 = vweird.f32 %v525
  %vm532 = vmor %vm530, %vm531
  %v533 = vsel %vm532, %v525, %v529
  %v534 = vand.u32 2147483647, %v509
  %vm535 = vcmp.eq.f32.partialorder %v534, 8.507059e+37
  %v536 = vand.u32 %v509, 2147483648
  %v537 = vor.u32 1.1754944e-38, %v536
  %v538 = vsel %vm535, %v537, %v533
  %v539 = vmul.f32 1.0, %v538
  %v540 = vmul.f32 %v524, 1.0614054
  %v541 = vmul.f32 %v539, 1.0614054
  %v542 = vsub.f32 %v540, 1.4531521
  %v543 = vsub.f32 %v541, 1.4531521
  %v544 = vmul.f32 %v542, %v524
  %v545 = vmul.f32 %v543, %v539
  %v546 = vadd.f32 %v544, 1.4214138
  %v547 = vadd.f32 %v545, 1.4214138
  %v548 = vmul.f32 %v546, %v524
  %v549 = vmul.f32 %v547, %v539
  %v550 = vsub.f32 %v548, 0.28449672
  %v551 = vsub.f32 %v549, 0.28449672
  %v552 = vmul.f32 %v550, %v524
  %v553 = vmul.f32 %v551, %v539
  %v554 = vadd.f32 %v552, 0.2548296
  %v555 = vadd.f32 %v553, 0.2548296
  %v556 = vmul.f32 %v554, %v524
  %v557 = vmul.f32 %v555, %v539
  %v558 = vsub.f32 0.0, %v504
  %v559 = vsub.f32 0.0, %v505
  %v560 = vmul.f32 %v558, %v504
  %v561 = vmul.f32 %v559, %v505
  %v562 = vmul.f32 %v560, 1.442695
  %v563 = vpow.pop %v562
  %v564 = vmul.f32 %v561, 1.442695
  %v565 = vpow.pop %v564
  %v566 = vmul.f32 %v556, %v563
  %v567 = vmul.f32 %v557, %v565
  %v568 = vsub.f32 1.0, %v566
  %v569 = vsub.f32 1.0, %v567
  %vm570 = vcmp.ge.f32.partialorder %v502, 0.0
  %vm571 = vcmp.ge.f32.partialorder %v503, 0.0
  %v572 = vsub.f32 0.0, %v568
  %v573 = vsub.f32 0.0, %v569
  %v574 = vsel %vm570, %v568, %v572
  %v575 = vsel %vm571, %v569, %v573
  %v576 = vmul.f32 %v498, 0.5
  %v577 = vmul.f32 %v500, 0.5
  %v578 = vadd.f32 %v574, 1.0
  %v579 = vadd.f32 %v575, 1.0
  %v580 = vmul.f32 %v576, %v578
  %v581 = vmul.f32 %v577, %v579
  %v582 = vpack.c.bf16 %v581, %v580
  %v583 = vld [vmem:[%s4 + $0x5] sm:$0x1]
  %v584 = vperm.slane %v583, 0
  %v593 = vunpack.c.l.b16 %v105
  %v594 = vunpack.c.l.b16 %v106
  %v595 = vunpack.c.l.b16 %v107
  %v596 = vunpack.c.l.b16 %v108
  %v597 = vunpack.c.l.b16 %v109
  %v598 = vunpack.c.l.b16 %v110
  %v599 = vunpack.c.l.b16 %v111
  %v600 = vunpack.c.l.b16 %v112
  %v601 = vpack.c.b16 %v594, %v593
  %v602 = vpack.c.b16 %v596, %v595
  %v603 = vpack.c.b16 %v598, %v597
  %v604 = vpack.c.b16 %v600, %v599
  %vm609 = vcmask 523264
  %v611 = vsel %vm609, %v582, 0
  %613 = vmatpush.bf16.msra.mxu0 0
  %614 = vmatpush.bf16.msra.mxu0 0
  %615 = vmatpush.bf16.msra.mxu0 0
  %616 = vmatpush.bf16.msra.mxu0 0
  %617 = vmatpush.bf16.msra.mxu0 %v604
  %618 = vmatpush.bf16.msra.mxu0 %v603
  %619 = vmatpush.bf16.msra.mxu0 %v602
  %620 = vmatpush.bf16.msra.mxu0 %v601
  %621 = vmatmul.bf16.gmra.mxu0 %v611
  %v622 = vpop.f32.mrf.mxu0
  %v623 = vadd.f32 %v584, %v622
  %v624 = vpop.f32.mrf.mxu0
  %v625 = vadd.f32 %v584, %v624
  %626 = vdwg.mxu0
  %v627 = vadd.f32 %v623, %v468
  %v628 = vadd.f32 %v625, %v469
  %v629 = vld [vmem:[%s4 + $0x6] sm:$0x1]
  %v630 = vld [vmem:[%s4 + $0x7] sm:$0x1]
  %v631 = vsel %vm39, %v627, 0.0
  %632 = vadd.xlane.f32.xlu0 %v631
  %v633 = vpop.xlane.xlu0 %632
  %v634 = vsel %vm39, %v628, 0.0
  %635 = vadd.xlane.f32.xlu0 %v634
  %v636 = vpop.xlane.xlu0 %635
  %v637 = vmul.f32 %v633, %v52
  %v638 = vmul.f32 %v636, %v52
  %v639 = vsub.f32 %v627, %v637
  %v640 = vsub.f32 %v628, %v638
  %v641 = vmul.f32 %v639, %v639
  %v642 = vmul.f32 %v640, %v640
  %v643 = vsel %vm39, %v641, 0.0
  %644 = vadd.xlane.f32.xlu0 %v643
  %v645 = vpop.xlane.xlu0 %644
  %v646 = vsel %vm39, %v642, 0.0
  %647 = vadd.xlane.f32.xlu0 %v646
  %v648 = vpop.xlane.xlu0 %647
  %v649 = vmul.f32 %v645, %v52
  %v650 = vmul.f32 %v648, %v52
  %v651 = vadd.f32 %v649, 1e-12
  %v652 = vadd.f32 %v650, 1e-12
  %v653 = vrsqrt.pop %v651
  %v654 = vmul.f32 %v653, %v651
  %v655 = vmul.f32 %v654, %v653
  %v656 = vmul.f32 0.5, %v655
  %v657 = vsub.f32 1.5, %v656
  %v658 = vmul.f32 %v653, %v657
  %vm659 = vweird.f32 %v651
  %vm660 = vweird.f32 %v653
  %vm661 = vmor %vm659, %vm660
  %v662 = vsel %vm661, %v653, %v658
  %v663 = vrsqrt.pop %v652
  %v664 = vmul.f32 %v663, %v652
  %v665 = vmul.f32 %v664, %v663
  %v666 = vmul.f32 0.5, %v665
  %v667 = vsub.f32 1.5, %v666
  %v668 = vmul.f32 %v663, %v667
  %vm669 = vweird.f32 %v652
  %vm670 = vweird.f32 %v663
  %vm671 = vmor %vm669, %vm670
  %v672 = vsel %vm671, %v663, %v668
  %v673 = vmul.f32 %v639, %v662
  %v674 = vmul.f32 %v640, %v672
  %v675 = vperm.slane %v629, 0
  %v676 = vmul.f32 %v673, %v675
  %v677 = vmul.f32 %v674, %v675
  %v678 = vperm.slane %v630, 0
  %v679 = vadd.f32 %v676, %v678
  %v680 = vadd.f32 %v677, %v678
  %s681 = scalar_lea.vmem %s3, 64
  %v682 = vld [vmem:[%s681] sm:$0xf]
  %v683 = vld [vmem:[%s681 + $0x4] sm:$0xf]
  %v684 = vld [vmem:[%s681 + $0x8] sm:$0xf]
  %v685 = vld [vmem:[%s681 + $0xc] sm:$0xf]
  %v686 = vld [vmem:[%s681 + $0x10] sm:$0xf]
  %v687 = vld [vmem:[%s681 + $0x14] sm:$0xf]
  %v688 = vld [vmem:[%s681 + $0x18] sm:$0xf]
  %v689 = vld [vmem:[%s681 + $0x1c] sm:$0xf]
  %v690 = vld [vmem:[%s681 + $0x20] sm:$0xf]
  %v691 = vld [vmem:[%s681 + $0x24] sm:$0xf]
  %v692 = vld [vmem:[%s681 + $0x28] sm:$0xf]
  %v693 = vld [vmem:[%s681 + $0x2c] sm:$0xf]
  %v694 = vld [vmem:[%s681 + $0x30] sm:$0xf]
  %v695 = vld [vmem:[%s681 + $0x34] sm:$0xf]
  %v696 = vld [vmem:[%s681 + $0x38] sm:$0xf]
  %v697 = vld [vmem:[%s681 + $0x3c] sm:$0xf]
  %v698 = vpack.c.bf16 %v680, %v679
  %s699 = scalar_lea.vmem %s4, 8
  %v700 = vld [vmem:[%s699] sm:$0x1]
  %v701 = vperm.slane %v700, 0
  %v706 = vunpack.c.l.b16 %v682
  %v707 = vunpack.c.l.b16 %v683
  %v708 = vunpack.c.l.b16 %v684
  %v709 = vunpack.c.l.b16 %v685
  %v710 = vpack.c.b16 %v707, %v706
  %v711 = vpack.c.b16 %v709, %v708
  %v715 = vsel %vm39, %v698, 0
  %717 = vmatpush.bf16.msra.mxu0 0
  %718 = vmatpush.bf16.msra.mxu0 0
  %719 = vmatpush.bf16.msra.mxu0 0
  %720 = vmatpush.bf16.msra.mxu0 0
  %721 = vmatpush.bf16.msra.mxu0 0
  %722 = vmatpush.bf16.msra.mxu0 0
  %723 = vmatpush.bf16.msra.mxu0 %v711
  %724 = vmatpush.bf16.msra.mxu0 %v710
  %725 = vmatmul.bf16.gmra.mxu0 %v715
  %v726 = vpop.f32.mrf.mxu0
  %v727 = vadd.f32 %v701, %v726
  %v728 = vpop.f32.mrf.mxu0
  %v729 = vadd.f32 %v701, %v728
  %730 = vdwg.mxu0
  %v731 = vmul.f32 %v727, 0.35355338
  %v732 = vmul.f32 %v729, 0.35355338
  %v733 = vmul.f32 %v731, %v27
  %v734 = vmul.f32 %v732, %v28
  %v735 = vmul.f32 %v731, %v29
  %v736 = vmul.f32 %v732, %v30
  %v737 = vmul.f32 %v731, %v31
  %v738 = vmul.f32 %v732, %v32
  %v739 = vmul.f32 %v731, %v33
  %v740 = vmul.f32 %v732, %v34
  %v741 = vpack.c.bf16 %v734, %v733
  %v742 = vpack.c.bf16 %v736, %v735
  %v743 = vpack.c.bf16 %v738, %v737
  %v744 = vpack.c.bf16 %v740, %v739
  %v745 = vpack.c.bf16 %v729, %v727
  %747 = vrot.lane.b32.xlu0 %v745, 96
  %v748 = vpop.permute.xlu0 %747
  %v750 = vsel %vm39, %v741, 0
  %v753 = vsel %vm39, %v742, 0
  %v756 = vsel %vm39, %v743, 0
  %v759 = vsel %vm39, %v744, 0
  %v762 = vsel %vm39, %v748, 0
  %764 = vmatpush.bf16.xpose.msra.mxu0 0
  %765 = vmatpush.bf16.xpose.msra.mxu0 0
  %766 = vmatpush.bf16.xpose.msra.mxu0 0
  %767 = vmatpush.bf16.xpose.msra.mxu0 0
  %768 = vmatpush.bf16.xpose.msra.mxu0 0
  %769 = vmatpush.bf16.xpose.msra.mxu0 0
  %770 = vmatpush.bf16.xpose.msra.mxu0 0
  %771 = vmatpush.bf16.xpose.msra.mxu0 %v762
  %772 = vmatmul.bf16.gmra.mxu0 %v750
  %v773 = vpop.f32.mrf.mxu0
  %v774 = vadd.f32 %v172, %v773
  %v775 = vpop.f32.mrf.mxu0
  %v776 = vadd.f32 %v174, %v775
  %777 = vmatmul.bf16.gmra.mxu0 %v753
  %v778 = vpop.f32.mrf.mxu0
  %v779 = vadd.f32 %v176, %v778
  %v780 = vpop.f32.mrf.mxu0
  %v781 = vadd.f32 %v178, %v780
  %782 = vmatmul.bf16.gmra.mxu0 %v756
  %v783 = vpop.f32.mrf.mxu0
  %v784 = vadd.f32 %v180, %v783
  %v785 = vpop.f32.mrf.mxu0
  %v786 = vadd.f32 %v182, %v785
  %787 = vmatmul.bf16.gmra.mxu0 %v759
  %v788 = vpop.f32.mrf.mxu0
  %v789 = vadd.f32 %v184, %v788
  %v790 = vpop.f32.mrf.mxu0
  %v791 = vadd.f32 %v186, %v790
  %792 = vdwg.mxu0
  %v793 = vsel %vm239, %v774, -inf
  %794 = vmax.xlane.f32.xlu0 %v793
  %v795 = vpop.xlane.xlu0 %794
  %v796 = vsel %vm239, %v776, -inf
  %797 = vmax.xlane.f32.xlu0 %v796
  %v798 = vpop.xlane.xlu0 %797
  %v799 = vsel %vm239, %v779, -inf
  %800 = vmax.xlane.f32.xlu0 %v799
  %v801 = vpop.xlane.xlu0 %800
  %v802 = vsel %vm239, %v781, -inf
  %803 = vmax.xlane.f32.xlu0 %v802
  %v804 = vpop.xlane.xlu0 %803
  %v805 = vsel %vm239, %v784, -inf
  %806 = vmax.xlane.f32.xlu0 %v805
  %v807 = vpop.xlane.xlu0 %806
  %v808 = vsel %vm239, %v786, -inf
  %809 = vmax.xlane.f32.xlu0 %v808
  %v810 = vpop.xlane.xlu0 %809
  %v811 = vsel %vm239, %v789, -inf
  %812 = vmax.xlane.f32.xlu0 %v811
  %v813 = vpop.xlane.xlu0 %812
  %v814 = vsel %vm239, %v791, -inf
  %815 = vmax.xlane.f32.xlu0 %v814
  %v816 = vpop.xlane.xlu0 %815
  %v817 = vsub.f32 %v774, %v795
  %v818 = vsub.f32 %v776, %v798
  %v819 = vsub.f32 %v779, %v801
  %v820 = vsub.f32 %v781, %v804
  %v821 = vsub.f32 %v784, %v807
  %v822 = vsub.f32 %v786, %v810
  %v823 = vsub.f32 %v789, %v813
  %v824 = vsub.f32 %v791, %v816
  %v825 = vmul.f32 %v817, 1.442695
  %v826 = vpow.pop %v825
  %v827 = vmul.f32 %v818, 1.442695
  %v828 = vpow.pop %v827
  %v829 = vmul.f32 %v819, 1.442695
  %v830 = vpow.pop %v829
  %v831 = vmul.f32 %v820, 1.442695
  %v832 = vpow.pop %v831
  %v833 = vmul.f32 %v821, 1.442695
  %v834 = vpow.pop %v833
  %v835 = vmul.f32 %v822, 1.442695
  %v836 = vpow.pop %v835
  %v837 = vmul.f32 %v823, 1.442695
  %v838 = vpow.pop %v837
  %v839 = vmul.f32 %v824, 1.442695
  %v840 = vpow.pop %v839
  %v841 = vsel %vm239, %v826, 0.0
  %842 = vadd.xlane.f32.xlu0 %v841
  %v843 = vpop.xlane.xlu0 %842
  %v844 = vsel %vm239, %v828, 0.0
  %845 = vadd.xlane.f32.xlu0 %v844
  %v846 = vpop.xlane.xlu0 %845
  %v847 = vsel %vm239, %v830, 0.0
  %848 = vadd.xlane.f32.xlu0 %v847
  %v849 = vpop.xlane.xlu0 %848
  %v850 = vsel %vm239, %v832, 0.0
  %851 = vadd.xlane.f32.xlu0 %v850
  %v852 = vpop.xlane.xlu0 %851
  %v853 = vsel %vm239, %v834, 0.0
  %854 = vadd.xlane.f32.xlu0 %v853
  %v855 = vpop.xlane.xlu0 %854
  %v856 = vsel %vm239, %v836, 0.0
  %857 = vadd.xlane.f32.xlu0 %v856
  %v858 = vpop.xlane.xlu0 %857
  %v859 = vsel %vm239, %v838, 0.0
  %860 = vadd.xlane.f32.xlu0 %v859
  %v861 = vpop.xlane.xlu0 %860
  %v862 = vsel %vm239, %v840, 0.0
  %863 = vadd.xlane.f32.xlu0 %v862
  %v864 = vpop.xlane.xlu0 %863
  %v865 = vrcp.pop %v843
  %v866 = vrcp.pop %v846
  %v867 = vrcp.pop %v849
  %v868 = vrcp.pop %v852
  %v869 = vrcp.pop %v855
  %v870 = vrcp.pop %v858
  %v871 = vrcp.pop %v861
  %v872 = vrcp.pop %v864
  %v873 = vmul.f32 %v826, %v865
  %v874 = vmul.f32 %v828, %v866
  %v875 = vmul.f32 %v830, %v867
  %v876 = vmul.f32 %v832, %v868
  %v877 = vmul.f32 %v834, %v869
  %v878 = vmul.f32 %v836, %v870
  %v879 = vmul.f32 %v838, %v871
  %v880 = vmul.f32 %v840, %v872
  %v881 = vpack.c.bf16 %v874, %v873
  %v882 = vpack.c.bf16 %v876, %v875
  %v883 = vpack.c.bf16 %v878, %v877
  %v884 = vpack.c.bf16 %v880, %v879
  %885 = vrot.lane.b32.xlu0 %v745, 64
  %v886 = vpop.permute.xlu0 %885
  %v889 = vsel %vm239, %v881, 0
  %v892 = vsel %vm239, %v882, 0
  %v895 = vsel %vm239, %v883, 0
  %v898 = vsel %vm239, %v884, 0
  %900 = vmatpush.bf16.msra.mxu0 0
  %901 = vmatpush.bf16.msra.mxu0 0
  %902 = vmatpush.bf16.msra.mxu0 0
  %903 = vmatpush.bf16.msra.mxu0 0
  %904 = vmatpush.bf16.msra.mxu0 0
  %905 = vmatpush.bf16.msra.mxu0 0
  %906 = vmatpush.bf16.msra.mxu0 0
  %907 = vmatpush.bf16.msra.mxu0 %v886
  %908 = vmatmul.bf16.gmra.mxu0 %v889
  %v909 = vpop.f32.mrf.mxu0
  %v910 = vadd.f32 0.0, %v909
  %v911 = vpop.f32.mrf.mxu0
  %v912 = vadd.f32 0.0, %v911
  %913 = vmatmul.bf16.gmra.mxu0 %v892
  %v914 = vpop.f32.mrf.mxu0
  %v915 = vadd.f32 0.0, %v914
  %v916 = vpop.f32.mrf.mxu0
  %v917 = vadd.f32 0.0, %v916
  %918 = vmatmul.bf16.gmra.mxu0 %v895
  %v919 = vpop.f32.mrf.mxu0
  %v920 = vadd.f32 0.0, %v919
  %v921 = vpop.f32.mrf.mxu0
  %v922 = vadd.f32 0.0, %v921
  %923 = vmatmul.bf16.gmra.mxu0 %v898
  %v924 = vpop.f32.mrf.mxu0
  %v925 = vadd.f32 0.0, %v924
  %v926 = vpop.f32.mrf.mxu0
  %v927 = vadd.f32 0.0, %v926
  %928 = vdwg.mxu0
  %v929 = vmul.f32 %v910, %v27
  %v930 = vmul.f32 %v912, %v28
  %v931 = vmul.f32 %v915, %v29
  %v932 = vmul.f32 %v917, %v30
  %v933 = vmul.f32 %v920, %v31
  %v934 = vmul.f32 %v922, %v32
  %v935 = vmul.f32 %v925, %v33
  %v936 = vmul.f32 %v927, %v34
  %v937 = vadd.f32 %v929, %v931
  %v938 = vadd.f32 %v930, %v932
  %v939 = vadd.f32 %v937, %v933
  %v940 = vadd.f32 %v938, %v934
  %v941 = vadd.f32 %v939, %v935
  %v942 = vadd.f32 %v940, %v936
  %v943 = vpack.c.bf16 %v942, %v941
  %v944 = vld [vmem:[%s699 + $0x1] sm:$0x1]
  %v945 = vperm.slane %v944, 0
  %946 = vrot.lane.b32.xlu0 %v710, 32
  %v947 = vpop.permute.xlu0 %946
  %948 = vrot.lane.b32.xlu0 %v711, 32
  %v949 = vpop.permute.xlu0 %948
  %v953 = vsel %vm39, %v943, 0
  %955 = vmatpush.bf16.msra.mxu0 0
  %956 = vmatpush.bf16.msra.mxu0 0
  %957 = vmatpush.bf16.msra.mxu0 0
  %958 = vmatpush.bf16.msra.mxu0 0
  %959 = vmatpush.bf16.msra.mxu0 0
  %960 = vmatpush.bf16.msra.mxu0 0
  %961 = vmatpush.bf16.msra.mxu0 %v949
  %962 = vmatpush.bf16.msra.mxu0 %v947
  %963 = vmatmul.bf16.gmra.mxu0 %v953
  %v964 = vpop.f32.mrf.mxu0
  %v965 = vadd.f32 %v945, %v964
  %v966 = vpop.f32.mrf.mxu0
  %v967 = vadd.f32 %v945, %v966
  %968 = vdwg.mxu0
  %v969 = vadd.f32 %v965, %v679
  %v970 = vadd.f32 %v967, %v680
  %v971 = vld [vmem:[%s699 + $0x2] sm:$0x1]
  %v972 = vld [vmem:[%s699 + $0x3] sm:$0x1]
  %v973 = vsel %vm39, %v969, 0.0
  %974 = vadd.xlane.f32.xlu0 %v973
  %v975 = vpop.xlane.xlu0 %974
  %v976 = vsel %vm39, %v970, 0.0
  %977 = vadd.xlane.f32.xlu0 %v976
  %v978 = vpop.xlane.xlu0 %977
  %v979 = vmul.f32 %v975, %v52
  %v980 = vmul.f32 %v978, %v52
  %v981 = vsub.f32 %v969, %v979
  %v982 = vsub.f32 %v970, %v980
  %v983 = vmul.f32 %v981, %v981
  %v984 = vmul.f32 %v982, %v982
  %v985 = vsel %vm39, %v983, 0.0
  %986 = vadd.xlane.f32.xlu0 %v985
  %v987 = vpop.xlane.xlu0 %986
  %v988 = vsel %vm39, %v984, 0.0
  %989 = vadd.xlane.f32.xlu0 %v988
  %v990 = vpop.xlane.xlu0 %989
  %v991 = vmul.f32 %v987, %v52
  %v992 = vmul.f32 %v990, %v52
  %v993 = vadd.f32 %v991, 1e-12
  %v994 = vadd.f32 %v992, 1e-12
  %v995 = vrsqrt.pop %v993
  %v996 = vmul.f32 %v995, %v993
  %v997 = vmul.f32 %v996, %v995
  %v998 = vmul.f32 0.5, %v997
  %v999 = vsub.f32 1.5, %v998
  %v1000 = vmul.f32 %v995, %v999
  %vm1001 = vweird.f32 %v993
  %vm1002 = vweird.f32 %v995
  %vm1003 = vmor %vm1001, %vm1002
  %v1004 = vsel %vm1003, %v995, %v1000
  %v1005 = vrsqrt.pop %v994
  %v1006 = vmul.f32 %v1005, %v994
  %v1007 = vmul.f32 %v1006, %v1005
  %v1008 = vmul.f32 0.5, %v1007
  %v1009 = vsub.f32 1.5, %v1008
  %v1010 = vmul.f32 %v1005, %v1009
  %vm1011 = vweird.f32 %v994
  %vm1012 = vweird.f32 %v1005
  %vm1013 = vmor %vm1011, %vm1012
  %v1014 = vsel %vm1013, %v1005, %v1010
  %v1015 = vmul.f32 %v981, %v1004
  %v1016 = vmul.f32 %v982, %v1014
  %v1017 = vperm.slane %v971, 0
  %v1018 = vmul.f32 %v1015, %v1017
  %v1019 = vmul.f32 %v1016, %v1017
  %v1020 = vperm.slane %v972, 0
  %v1021 = vadd.f32 %v1018, %v1020
  %v1022 = vadd.f32 %v1019, %v1020
  %v1023 = vpack.c.bf16 %v1022, %v1021
  %v1024 = vld [vmem:[%s699 + $0x4] sm:$0x1]
  %v1025 = vperm.slane %v1024, 0
  %v1030 = vunpack.c.l.b16 %v686
  %v1031 = vunpack.c.l.b16 %v687
  %v1032 = vunpack.c.l.b16 %v688
  %v1033 = vunpack.c.l.b16 %v689
  %v1034 = vpack.c.b16 %v1031, %v1030
  %v1035 = vpack.c.b16 %v1033, %v1032
  %v1039 = vsel %vm39, %v1023, 0
  %1041 = vmatpush.bf16.msra.mxu0 0
  %1042 = vmatpush.bf16.msra.mxu0 0
  %1043 = vmatpush.bf16.msra.mxu0 0
  %1044 = vmatpush.bf16.msra.mxu0 0
  %1045 = vmatpush.bf16.msra.mxu0 0
  %1046 = vmatpush.bf16.msra.mxu0 0
  %1047 = vmatpush.bf16.msra.mxu0 %v1035
  %1048 = vmatpush.bf16.msra.mxu0 %v1034
  %1049 = vmatmul.bf16.gmra.mxu0 %v1039
  %v1050 = vpop.f32.mrf.mxu0
  %v1051 = vadd.f32 %v1025, %v1050
  %v1052 = vpop.f32.mrf.mxu0
  %v1053 = vadd.f32 %v1025, %v1052
  %1054 = vdwg.mxu0
  %v1055 = vmul.f32 %v1051, 0.70710677
  %v1056 = vmul.f32 %v1053, 0.70710677
  %v1057 = vand.u32 2147483647, %v1055
  %v1058 = vand.u32 2147483647, %v1056
  %v1059 = vmul.f32 %v1057, 0.3275911
  %v1060 = vmul.f32 %v1058, 0.3275911
  %v1061 = vadd.f32 %v1059, 1.0
  %v1062 = vadd.f32 %v1060, 1.0
  %v1063 = vrcp.pop %v1061
  %v1064 = vmul.f32 %v1061, %v1063
  %v1065 = vsub.f32 1.0, %v1064
  %v1066 = vmul.f32 %v1063, %v1065
  %v1067 = vadd.f32 %v1063, %v1066
  %vm1068 = vweird.f32 %v1061
  %vm1069 = vweird.f32 %v1063
  %vm1070 = vmor %vm1068, %vm1069
  %v1071 = vsel %vm1070, %v1063, %v1067
  %v1072 = vand.u32 2147483647, %v1061
  %vm1073 = vcmp.eq.f32.partialorder %v1072, 8.507059e+37
  %v1074 = vand.u32 %v1061, 2147483648
  %v1075 = vor.u32 1.1754944e-38, %v1074
  %v1076 = vsel %vm1073, %v1075, %v1071
  %v1077 = vmul.f32 1.0, %v1076
  %v1078 = vrcp.pop %v1062
  %v1079 = vmul.f32 %v1062, %v1078
  %v1080 = vsub.f32 1.0, %v1079
  %v1081 = vmul.f32 %v1078, %v1080
  %v1082 = vadd.f32 %v1078, %v1081
  %vm1083 = vweird.f32 %v1062
  %vm1084 = vweird.f32 %v1078
  %vm1085 = vmor %vm1083, %vm1084
  %v1086 = vsel %vm1085, %v1078, %v1082
  %v1087 = vand.u32 2147483647, %v1062
  %vm1088 = vcmp.eq.f32.partialorder %v1087, 8.507059e+37
  %v1089 = vand.u32 %v1062, 2147483648
  %v1090 = vor.u32 1.1754944e-38, %v1089
  %v1091 = vsel %vm1088, %v1090, %v1086
  %v1092 = vmul.f32 1.0, %v1091
  %v1093 = vmul.f32 %v1077, 1.0614054
  %v1094 = vmul.f32 %v1092, 1.0614054
  %v1095 = vsub.f32 %v1093, 1.4531521
  %v1096 = vsub.f32 %v1094, 1.4531521
  %v1097 = vmul.f32 %v1095, %v1077
  %v1098 = vmul.f32 %v1096, %v1092
  %v1099 = vadd.f32 %v1097, 1.4214138
  %v1100 = vadd.f32 %v1098, 1.4214138
  %v1101 = vmul.f32 %v1099, %v1077
  %v1102 = vmul.f32 %v1100, %v1092
  %v1103 = vsub.f32 %v1101, 0.28449672
  %v1104 = vsub.f32 %v1102, 0.28449672
  %v1105 = vmul.f32 %v1103, %v1077
  %v1106 = vmul.f32 %v1104, %v1092
  %v1107 = vadd.f32 %v1105, 0.2548296
  %v1108 = vadd.f32 %v1106, 0.2548296
  %v1109 = vmul.f32 %v1107, %v1077
  %v1110 = vmul.f32 %v1108, %v1092
  %v1111 = vsub.f32 0.0, %v1057
  %v1112 = vsub.f32 0.0, %v1058
  %v1113 = vmul.f32 %v1111, %v1057
  %v1114 = vmul.f32 %v1112, %v1058
  %v1115 = vmul.f32 %v1113, 1.442695
  %v1116 = vpow.pop %v1115
  %v1117 = vmul.f32 %v1114, 1.442695
  %v1118 = vpow.pop %v1117
  %v1119 = vmul.f32 %v1109, %v1116
  %v1120 = vmul.f32 %v1110, %v1118
  %v1121 = vsub.f32 1.0, %v1119
  %v1122 = vsub.f32 1.0, %v1120
  %vm1123 = vcmp.ge.f32.partialorder %v1055, 0.0
  %vm1124 = vcmp.ge.f32.partialorder %v1056, 0.0
  %v1125 = vsub.f32 0.0, %v1121
  %v1126 = vsub.f32 0.0, %v1122
  %v1127 = vsel %vm1123, %v1121, %v1125
  %v1128 = vsel %vm1124, %v1122, %v1126
  %v1129 = vmul.f32 %v1051, 0.5
  %v1130 = vmul.f32 %v1053, 0.5
  %v1131 = vadd.f32 %v1127, 1.0
  %v1132 = vadd.f32 %v1128, 1.0
  %v1133 = vmul.f32 %v1129, %v1131
  %v1134 = vmul.f32 %v1130, %v1132
  %v1135 = vpack.c.bf16 %v1134, %v1133
  %v1136 = vld [vmem:[%s699 + $0x5] sm:$0x1]
  %v1137 = vperm.slane %v1136, 0
  %v1146 = vunpack.c.l.b16 %v690
  %v1147 = vunpack.c.l.b16 %v691
  %v1148 = vunpack.c.l.b16 %v692
  %v1149 = vunpack.c.l.b16 %v693
  %v1150 = vunpack.c.l.b16 %v694
  %v1151 = vunpack.c.l.b16 %v695
  %v1152 = vunpack.c.l.b16 %v696
  %v1153 = vunpack.c.l.b16 %v697
  %v1154 = vpack.c.b16 %v1147, %v1146
  %v1155 = vpack.c.b16 %v1149, %v1148
  %v1156 = vpack.c.b16 %v1151, %v1150
  %v1157 = vpack.c.b16 %v1153, %v1152
  %v1163 = vsel %vm609, %v1135, 0
  %1165 = vmatpush.bf16.msra.mxu0 0
  %1166 = vmatpush.bf16.msra.mxu0 0
  %1167 = vmatpush.bf16.msra.mxu0 0
  %1168 = vmatpush.bf16.msra.mxu0 0
  %1169 = vmatpush.bf16.msra.mxu0 %v1157
  %1170 = vmatpush.bf16.msra.mxu0 %v1156
  %1171 = vmatpush.bf16.msra.mxu0 %v1155
  %1172 = vmatpush.bf16.msra.mxu0 %v1154
  %1173 = vmatmul.bf16.gmra.mxu0 %v1163
  %v1174 = vpop.f32.mrf.mxu0
  %v1175 = vadd.f32 %v1137, %v1174
  %v1176 = vpop.f32.mrf.mxu0
  %v1177 = vadd.f32 %v1137, %v1176
  %1178 = vdwg.mxu0
  %v1179 = vadd.f32 %v1175, %v1021
  %v1180 = vadd.f32 %v1177, %v1022
  %v1181 = vld [vmem:[%s699 + $0x6] sm:$0x1]
  %v1182 = vld [vmem:[%s699 + $0x7] sm:$0x1]
  %v1183 = vsel %vm39, %v1179, 0.0
  %1184 = vadd.xlane.f32.xlu0 %v1183
  %v1185 = vpop.xlane.xlu0 %1184
  %v1186 = vsel %vm39, %v1180, 0.0
  %1187 = vadd.xlane.f32.xlu0 %v1186
  %v1188 = vpop.xlane.xlu0 %1187
  %v1189 = vmul.f32 %v1185, %v52
  %v1190 = vmul.f32 %v1188, %v52
  %v1191 = vsub.f32 %v1179, %v1189
  %v1192 = vsub.f32 %v1180, %v1190
  %v1193 = vmul.f32 %v1191, %v1191
  %v1194 = vmul.f32 %v1192, %v1192
  %v1195 = vsel %vm39, %v1193, 0.0
  %1196 = vadd.xlane.f32.xlu0 %v1195
  %v1197 = vpop.xlane.xlu0 %1196
  %v1198 = vsel %vm39, %v1194, 0.0
  %1199 = vadd.xlane.f32.xlu0 %v1198
  %v1200 = vpop.xlane.xlu0 %1199
  %v1201 = vmul.f32 %v1197, %v52
  %v1202 = vmul.f32 %v1200, %v52
  %v1203 = vadd.f32 %v1201, 1e-12
  %v1204 = vadd.f32 %v1202, 1e-12
  %v1205 = vrsqrt.pop %v1203
  %v1206 = vmul.f32 %v1205, %v1203
  %v1207 = vmul.f32 %v1206, %v1205
  %v1208 = vmul.f32 0.5, %v1207
  %v1209 = vsub.f32 1.5, %v1208
  %v1210 = vmul.f32 %v1205, %v1209
  %vm1211 = vweird.f32 %v1203
  %vm1212 = vweird.f32 %v1205
  %vm1213 = vmor %vm1211, %vm1212
  %v1214 = vsel %vm1213, %v1205, %v1210
  %v1215 = vrsqrt.pop %v1204
  %v1216 = vmul.f32 %v1215, %v1204
  %v1217 = vmul.f32 %v1216, %v1215
  %v1218 = vmul.f32 0.5, %v1217
  %v1219 = vsub.f32 1.5, %v1218
  %v1220 = vmul.f32 %v1215, %v1219
  %vm1221 = vweird.f32 %v1204
  %vm1222 = vweird.f32 %v1215
  %vm1223 = vmor %vm1221, %vm1222
  %v1224 = vsel %vm1223, %v1215, %v1220
  %v1225 = vmul.f32 %v1191, %v1214
  %v1226 = vmul.f32 %v1192, %v1224
  %v1227 = vperm.slane %v1181, 0
  %v1228 = vmul.f32 %v1225, %v1227
  %v1229 = vmul.f32 %v1226, %v1227
  %v1230 = vperm.slane %v1182, 0
  %v1231 = vadd.f32 %v1228, %v1230
  %v1232 = vadd.f32 %v1229, %v1230
  %1233 = vrot.lane.b32.xlu0 %v27, 80
  %v1234 = vpop.permute.xlu0 %1233
  %v1235 = vsel %vm239, %v1234, 0
  %1237 = vmatpush.msra.mxu0 0.0
  %1238 = vmatpush.msra.mxu0 0.0
  %1239 = vmatpush.msra.mxu0 0.0
  %1240 = vmatpush.msra.mxu0 0.0
  %1241 = vmatpush.msra.mxu0 0.0
  %1242 = vmatpush.msra.mxu0 0.0
  %1243 = vmatpush.msra.mxu0 0.0
  %1244 = vmatpush.msra.mxu0 0.0
  %1245 = vmatpush.msra.mxu0 0.0
  %1246 = vmatpush.msra.mxu0 0.0
  %1247 = vmatpush.msra.mxu0 0.0
  %1248 = vmatpush.msra.mxu0 0.0
  %1249 = vmatpush.msra.mxu0 0.0
  %1250 = vmatpush.msra.mxu0 0.0
  %1251 = vmatpush.msra.mxu0 %v1232
  %1252 = vmatpush.msra.mxu0 %v1231
  %1253 = vmatmul.f32.gmra.mxu0 %v1235
  %v1254 = vpop.f32.mrf.mxu0
  %v1255 = vadd.f32 0.0, %v1254
  %1256 = vdwg.mxu0
  %v1258 = vrot.slane %v1255, 2
  %1259 = vrot.lane.b32.xlu0 %v1258, 32
  %v1260 = vpop.permute.xlu0 %1259
  %v1262 = vsel %vm39, %v1255, %v1260
  %v1263 = vld [vmem:[%s5] sm:$0xf]
  %v1264 = vld [vmem:[%s5 + $0x4] sm:$0xf]
  %v1265 = vld [vmem:[%s5 + $0x8] sm:$0xf]
  %v1266 = vld [vmem:[%s5 + $0xc] sm:$0xf]
  %v1267 = vld [vmem:[%s5 + $0x10] sm:$0xf]
  %v1268 = vld [vmem:[%s5 + $0x14] sm:$0xf]
  %v1269 = vld [vmem:[%s5 + $0x18] sm:$0xf]
  %v1270 = vld [vmem:[%s5 + $0x1c] sm:$0xf]
  %v1271 = vld [vmem:[%s5 + $0x20] sm:$0xf]
  %v1272 = vld [vmem:[%s5 + $0x24] sm:$0xf]
  %v1273 = vld [vmem:[%s5 + $0x28] sm:$0xf]
  %v1274 = vld [vmem:[%s5 + $0x2c] sm:$0xf]
  %v1275 = vld [vmem:[%s5 + $0x30] sm:$0xf]
  %v1276 = vld [vmem:[%s5 + $0x34] sm:$0xf]
  %v1277 = vld [vmem:[%s5 + $0x38] sm:$0xf]
  %v1278 = vld [vmem:[%s5 + $0x3c] sm:$0xf]
  %v1279 = vpack.c.bf16 %v1262, %v1262
  %v1280 = vld [vmem:[%s6 + $0x2] sm:$0x1]
  %v1281 = vperm.slane %v1280, 0
  %v1290 = vunpack.c.l.b16 %v1263
  %v1291 = vunpack.c.l.b16 %v1264
  %v1292 = vunpack.c.l.b16 %v1265
  %v1293 = vunpack.c.l.b16 %v1266
  %v1294 = vunpack.c.l.b16 %v1267
  %v1295 = vunpack.c.l.b16 %v1268
  %v1296 = vunpack.c.l.b16 %v1269
  %v1297 = vunpack.c.l.b16 %v1270
  %v1298 = vpack.c.b16 %v1291, %v1290
  %v1299 = vpack.c.b16 %v1293, %v1292
  %v1300 = vpack.c.b16 %v1295, %v1294
  %v1301 = vpack.c.b16 %v1297, %v1296
  %v1307 = vsel %vm609, %v1279, 0
  %1309 = vmatpush.bf16.msra.mxu0 0
  %1310 = vmatpush.bf16.msra.mxu0 0
  %1311 = vmatpush.bf16.msra.mxu0 0
  %1312 = vmatpush.bf16.msra.mxu0 0
  %1313 = vmatpush.bf16.msra.mxu0 %v1301
  %1314 = vmatpush.bf16.msra.mxu0 %v1300
  %1315 = vmatpush.bf16.msra.mxu0 %v1299
  %1316 = vmatpush.bf16.msra.mxu0 %v1298
  %1317 = vmatmul.bf16.gmra.mxu0 %v1307
  %v1318 = vpop.f32.mrf.mxu0
  %v1319 = vadd.f32 %v1281, %v1318
  %v1320 = vpop.f32.mrf.mxu0
  %1321 = vdwg.mxu0
  %v1322 = vld [vmem:[%s6 + $0x3] sm:$0x1]
  %v1323 = vperm.slane %v1322, 0
  %v1332 = vunpack.c.l.b16 %v1271
  %v1333 = vunpack.c.l.b16 %v1272
  %v1334 = vunpack.c.l.b16 %v1273
  %v1335 = vunpack.c.l.b16 %v1274
  %v1336 = vunpack.c.l.b16 %v1275
  %v1337 = vunpack.c.l.b16 %v1276
  %v1338 = vunpack.c.l.b16 %v1277
  %v1339 = vunpack.c.l.b16 %v1278
  %v1340 = vpack.c.b16 %v1333, %v1332
  %v1341 = vpack.c.b16 %v1335, %v1334
  %v1342 = vpack.c.b16 %v1337, %v1336
  %v1343 = vpack.c.b16 %v1339, %v1338
  %1348 = vmatpush.bf16.msra.mxu0 0
  %1349 = vmatpush.bf16.msra.mxu0 0
  %1350 = vmatpush.bf16.msra.mxu0 0
  %1351 = vmatpush.bf16.msra.mxu0 0
  %1352 = vmatpush.bf16.msra.mxu0 %v1343
  %1353 = vmatpush.bf16.msra.mxu0 %v1342
  %1354 = vmatpush.bf16.msra.mxu0 %v1341
  %1355 = vmatpush.bf16.msra.mxu0 %v1340
  %1356 = vmatmul.bf16.gmra.mxu0 %v1307
  %v1357 = vpop.f32.mrf.mxu0
  %v1358 = vadd.f32 %v1323, %v1357
  %v1359 = vpop.f32.mrf.mxu0
  %1360 = vdwg.mxu0
  %v1361 = vlaneseq
  %v1362 = vshrl.u32 %v1361, 7
  %v1363 = vadd.s32 %v1362, 8
  %vm1364 = vcmp.ge.s32.totalorder %v1362, 0
  %vm1365 = vcmp.ge.s32.totalorder %v1363, 0
  %vm1366 = vcmp.lt.s32.totalorder %v1362, 8
  %vm1367 = vcmp.lt.s32.totalorder %v1363, 8
  %vm1368 = vmand %vm1364, %vm1366
  %vm1369 = vmand %vm1365, %vm1367
  %v1370 = vsel %vm1368, 1, 0
  %v1371 = vsel %vm1369, 1, 0
  %v1372 = vcvt.s32.f32 %v1370
  %v1373 = vcvt.s32.f32 %v1371
  %v1374 = vperm.slane %v1319, 0
  %v1375 = vmul.f32 %v1372, %v1374
  %v1376 = vmul.f32 %v1373, %v1374
  %v1377 = vadd.f32 %v1375, 0.0
  %v1378 = vadd.f32 %v1376, 0.0
  %v1379 = vperm.slane %v1358, 0
  %v1380 = vmul.f32 %v1372, %v1379
  %v1381 = vmul.f32 %v1373, %v1379
  %v1382 = vadd.f32 %v1380, 0.0
  %v1383 = vadd.f32 %v1381, 0.0
  %vm1384 = vcmp.ge.s32.totalorder %v1362, 8
  %vm1385 = vcmp.ge.s32.totalorder %v1363, 8
  %vm1386 = vcmp.lt.s32.totalorder %v1362, 16
  %vm1387 = vcmp.lt.s32.totalorder %v1363, 16
  %vm1388 = vmand %vm1384, %vm1386
  %vm1389 = vmand %vm1385, %vm1387
  %v1390 = vsel %vm1388, 1, 0
  %v1391 = vsel %vm1389, 1, 0
  %v1392 = vcvt.s32.f32 %v1390
  %v1393 = vcvt.s32.f32 %v1391
  %v1394 = vperm.slane %v1319, 1
  %v1395 = vmul.f32 %v1392, %v1394
  %v1396 = vmul.f32 %v1393, %v1394
  %v1397 = vadd.f32 %v1377, %v1395
  %v1398 = vadd.f32 %v1378, %v1396
  %v1399 = vperm.slane %v1358, 1
  %v1400 = vmul.f32 %v1392, %v1399
  %v1401 = vmul.f32 %v1393, %v1399
  %v1402 = vadd.f32 %v1382, %v1400
  %v1403 = vadd.f32 %v1383, %v1401
  %v1404 = vsel %vm39, %v1231, 0.0
  %1405 = vadd.xlane.f32.xlu0 %v1404
  %v1406 = vpop.xlane.xlu0 %1405
  %v1407 = vsel %vm39, %v1232, 0.0
  %1408 = vadd.xlane.f32.xlu0 %v1407
  %v1409 = vpop.xlane.xlu0 %1408
  %v1410 = vmul.f32 %v1406, %v52
  %v1411 = vmul.f32 %v1409, %v52
  %v1412 = vsub.f32 %v1231, %v1410
  %v1413 = vsub.f32 %v1232, %v1411
  %v1414 = vmul.f32 %v1412, %v1412
  %v1415 = vmul.f32 %v1413, %v1413
  %v1416 = vsel %vm39, %v1414, 0.0
  %1417 = vadd.xlane.f32.xlu0 %v1416
  %v1418 = vpop.xlane.xlu0 %1417
  %v1419 = vsel %vm39, %v1415, 0.0
  %1420 = vadd.xlane.f32.xlu0 %v1419
  %v1421 = vpop.xlane.xlu0 %1420
  %v1422 = vmul.f32 %v1418, %v52
  %v1423 = vmul.f32 %v1421, %v52
  %v1424 = vadd.f32 %v1422, 1e-12
  %v1425 = vadd.f32 %v1423, 1e-12
  %v1426 = vrsqrt.pop %v1424
  %v1427 = vmul.f32 %v1426, %v1424
  %v1428 = vmul.f32 %v1427, %v1426
  %v1429 = vmul.f32 0.5, %v1428
  %v1430 = vsub.f32 1.5, %v1429
  %v1431 = vmul.f32 %v1426, %v1430
  %vm1432 = vweird.f32 %v1424
  %vm1433 = vweird.f32 %v1426
  %vm1434 = vmor %vm1432, %vm1433
  %v1435 = vsel %vm1434, %v1426, %v1431
  %v1436 = vrsqrt.pop %v1425
  %v1437 = vmul.f32 %v1436, %v1425
  %v1438 = vmul.f32 %v1437, %v1436
  %v1439 = vmul.f32 0.5, %v1438
  %v1440 = vsub.f32 1.5, %v1439
  %v1441 = vmul.f32 %v1436, %v1440
  %vm1442 = vweird.f32 %v1425
  %vm1443 = vweird.f32 %v1436
  %vm1444 = vmor %vm1442, %vm1443
  %v1445 = vsel %vm1444, %v1436, %v1441
  %v1446 = vmul.f32 %v1412, %v1435
  %v1447 = vmul.f32 %v1413, %v1445
  %v1448 = vmul.f32 %v1446, %v1397
  %v1449 = vmul.f32 %v1447, %v1398
  %v1450 = vadd.f32 %v1448, %v1402
  %v1451 = vadd.f32 %v1449, %v1403
  %v1452 = vld [vmem:[%s1] sm:$0xff]
  %v1453 = vld [vmem:[%s1 + $0x8] sm:$0xff]
  %1456 = vrot.lane.b32.xlu0 %v1452, 32
  %v1457 = vpop.permute.xlu0 %1456
  %1458 = vrot.lane.b32.xlu0 %v1453, 32
  %v1459 = vpop.permute.xlu0 %1458
  %v1462 = vsel %vm39, %v1450, %v1457
  %v1463 = vsel %vm39, %v1451, %v1459
  %v1464 = vld [vmem:[%s6 + $0x4] sm:$0x1]
  %v1465 = vld [vmem:[%s6 + $0x5] sm:$0x1]
  %v1466 = vsel %vm609, %v1462, 0.0
  %1467 = vadd.xlane.f32.xlu0 %v1466
  %v1468 = vpop.xlane.xlu0 %1467
  %v1469 = vsel %vm609, %v1463, 0.0
  %1470 = vadd.xlane.f32.xlu0 %v1469
  %v1471 = vpop.xlane.xlu0 %1470
  %v1472 = vrcp.pop 64.0
  %v1473 = vmul.f32 64.0, %v1472
  %v1474 = vsub.f32 1.0, %v1473
  %v1475 = vmul.f32 %v1472, %v1474
  %v1476 = vadd.f32 %v1472, %v1475
  %vm1477 = vweird.f32 %v1472
  %v1478 = vsel %vm1477, %v1472, %v1476
  %v1479 = vmul.f32 %v1468, %v1478
  %v1480 = vmul.f32 %v1471, %v1478
  %v1481 = vsub.f32 %v1462, %v1479
  %v1482 = vsub.f32 %v1463, %v1480
  %v1483 = vmul.f32 %v1481, %v1481
  %v1484 = vmul.f32 %v1482, %v1482
  %v1485 = vsel %vm609, %v1483, 0.0
  %1486 = vadd.xlane.f32.xlu0 %v1485
  %v1487 = vpop.xlane.xlu0 %1486
  %v1488 = vsel %vm609, %v1484, 0.0
  %1489 = vadd.xlane.f32.xlu0 %v1488
  %v1490 = vpop.xlane.xlu0 %1489
  %v1491 = vmul.f32 %v1487, %v1478
  %v1492 = vmul.f32 %v1490, %v1478
  %v1493 = vadd.f32 %v1491, 1e-12
  %v1494 = vadd.f32 %v1492, 1e-12
  %v1495 = vrsqrt.pop %v1493
  %v1496 = vmul.f32 %v1495, %v1493
  %v1497 = vmul.f32 %v1496, %v1495
  %v1498 = vmul.f32 0.5, %v1497
  %v1499 = vsub.f32 1.5, %v1498
  %v1500 = vmul.f32 %v1495, %v1499
  %vm1501 = vweird.f32 %v1493
  %vm1502 = vweird.f32 %v1495
  %vm1503 = vmor %vm1501, %vm1502
  %v1504 = vsel %vm1503, %v1495, %v1500
  %v1505 = vrsqrt.pop %v1494
  %v1506 = vmul.f32 %v1505, %v1494
  %v1507 = vmul.f32 %v1506, %v1505
  %v1508 = vmul.f32 0.5, %v1507
  %v1509 = vsub.f32 1.5, %v1508
  %v1510 = vmul.f32 %v1505, %v1509
  %vm1511 = vweird.f32 %v1494
  %vm1512 = vweird.f32 %v1505
  %vm1513 = vmor %vm1511, %vm1512
  %v1514 = vsel %vm1513, %v1505, %v1510
  %v1515 = vmul.f32 %v1481, %v1504
  %v1516 = vmul.f32 %v1482, %v1514
  %v1517 = vperm.slane %v1464, 0
  %v1518 = vmul.f32 %v1515, %v1517
  %v1519 = vmul.f32 %v1516, %v1517
  %v1520 = vperm.slane %v1465, 0
  %v1521 = vadd.f32 %v1518, %v1520
  %v1522 = vadd.f32 %v1519, %v1520
  %v1523 = vld [vmem:[%s5 + $0x40] sm:$0xf]
  %v1524 = vld [vmem:[%s5 + $0x44] sm:$0xf]
  %v1525 = vld [vmem:[%s5 + $0x48] sm:$0xf]
  %v1526 = vld [vmem:[%s5 + $0x4c] sm:$0xf]
  %v1527 = vld [vmem:[%s5 + $0x50] sm:$0xf]
  %v1528 = vld [vmem:[%s5 + $0x54] sm:$0xf]
  %v1529 = vld [vmem:[%s5 + $0x58] sm:$0xf]
  %v1530 = vld [vmem:[%s5 + $0x5c] sm:$0xf]
  %v1531 = vld [vmem:[%s5 + $0x60] sm:$0xf]
  %v1532 = vld [vmem:[%s5 + $0x64] sm:$0xf]
  %v1533 = vld [vmem:[%s5 + $0x68] sm:$0xf]
  %v1534 = vld [vmem:[%s5 + $0x6c] sm:$0xf]
  %v1535 = vld [vmem:[%s5 + $0x70] sm:$0xf]
  %v1536 = vld [vmem:[%s5 + $0x74] sm:$0xf]
  %v1537 = vld [vmem:[%s5 + $0x78] sm:$0xf]
  %v1538 = vld [vmem:[%s5 + $0x7c] sm:$0xf]
  %v1539 = vld [vmem:[%s5 + $0x80] sm:$0xf]
  %v1540 = vld [vmem:[%s5 + $0x84] sm:$0xf]
  %v1541 = vld [vmem:[%s5 + $0x88] sm:$0xf]
  %v1542 = vld [vmem:[%s5 + $0x8c] sm:$0xf]
  %v1543 = vld [vmem:[%s5 + $0x90] sm:$0xf]
  %v1544 = vld [vmem:[%s5 + $0x94] sm:$0xf]
  %v1545 = vld [vmem:[%s5 + $0x98] sm:$0xf]
  %v1546 = vld [vmem:[%s5 + $0x9c] sm:$0xf]
  %v1547 = vpack.c.bf16 %v1522, %v1521
  %v1548 = vld [vmem:[%s6 + $0x6] sm:$0x1]
  %v1549 = vperm.slane %v1548, 0
  %v1558 = vunpack.c.l.b16 %v1523
  %v1559 = vunpack.c.l.b16 %v1524
  %v1560 = vunpack.c.l.b16 %v1525
  %v1561 = vunpack.c.l.b16 %v1526
  %v1562 = vunpack.c.l.b16 %v1527
  %v1563 = vunpack.c.l.b16 %v1528
  %v1564 = vunpack.c.l.b16 %v1529
  %v1565 = vunpack.c.l.b16 %v1530
  %v1566 = vpack.c.b16 %v1559, %v1558
  %v1567 = vpack.c.b16 %v1561, %v1560
  %v1568 = vpack.c.b16 %v1563, %v1562
  %v1569 = vpack.c.b16 %v1565, %v1564
  %v1575 = vsel %vm609, %v1547, 0
  %1577 = vmatpush.bf16.msra.mxu0 0
  %1578 = vmatpush.bf16.msra.mxu0 0
  %1579 = vmatpush.bf16.msra.mxu0 0
  %1580 = vmatpush.bf16.msra.mxu0 0
  %1581 = vmatpush.bf16.msra.mxu0 %v1569
  %1582 = vmatpush.bf16.msra.mxu0 %v1568
  %1583 = vmatpush.bf16.msra.mxu0 %v1567
  %1584 = vmatpush.bf16.msra.mxu0 %v1566
  %1585 = vmatmul.bf16.gmra.mxu0 %v1575
  %v1586 = vpop.f32.mrf.mxu0
  %v1587 = vadd.f32 %v1549, %v1586
  %v1588 = vpop.f32.mrf.mxu0
  %v1589 = vadd.f32 %v1549, %v1588
  %1590 = vdwg.mxu0
  %v1591 = vmax.f32 %v1587, 0.0
  %v1592 = vmax.f32 %v1589, 0.0
  %v1593 = vpack.c.bf16 %v1592, %v1591
  %v1594 = vld [vmem:[%s6 + $0x7] sm:$0x1]
  %v1595 = vperm.slane %v1594, 0
  %v1612 = vunpack.c.l.b16 %v1531
  %v1613 = vunpack.c.l.b16 %v1532
  %v1614 = vunpack.c.l.b16 %v1533
  %v1615 = vunpack.c.l.b16 %v1534
  %v1616 = vunpack.c.l.b16 %v1535
  %v1617 = vunpack.c.l.b16 %v1536
  %v1618 = vunpack.c.l.b16 %v1537
  %v1619 = vunpack.c.l.b16 %v1538
  %v1620 = vunpack.c.l.b16 %v1539
  %v1621 = vunpack.c.l.b16 %v1540
  %v1622 = vunpack.c.l.b16 %v1541
  %v1623 = vunpack.c.l.b16 %v1542
  %v1624 = vunpack.c.l.b16 %v1543
  %v1625 = vunpack.c.l.b16 %v1544
  %v1626 = vunpack.c.l.b16 %v1545
  %v1627 = vunpack.c.l.b16 %v1546
  %v1628 = vpack.c.b16 %v1613, %v1612
  %v1629 = vpack.c.b16 %v1615, %v1614
  %v1630 = vpack.c.b16 %v1617, %v1616
  %v1631 = vpack.c.b16 %v1619, %v1618
  %v1632 = vpack.c.b16 %v1621, %v1620
  %v1633 = vpack.c.b16 %v1623, %v1622
  %v1634 = vpack.c.b16 %v1625, %v1624
  %v1635 = vpack.c.b16 %v1627, %v1626
  %1644 = vmatpush.bf16.msra.mxu0 %v1635
  %1645 = vmatpush.bf16.msra.mxu0 %v1634
  %1646 = vmatpush.bf16.msra.mxu0 %v1633
  %1647 = vmatpush.bf16.msra.mxu0 %v1632
  %1648 = vmatpush.bf16.msra.mxu0 %v1631
  %1649 = vmatpush.bf16.msra.mxu0 %v1630
  %1650 = vmatpush.bf16.msra.mxu0 %v1629
  %1651 = vmatpush.bf16.msra.mxu0 %v1628
  %1652 = vmatmul.bf16.gmra.mxu0 %v1593
  %v1653 = vpop.f32.mrf.mxu0
  %v1654 = vadd.f32 %v1595, %v1653
  %v1655 = vpop.f32.mrf.mxu0
  %v1656 = vadd.f32 %v1595, %v1655
  %1657 = vdwg.mxu0
  %v1658 = vxor.u32 %v1654, 2147483648
  %v1659 = vxor.u32 %v1656, 2147483648
  %v1660 = vmul.f32 %v1658, 1.442695
  %v1661 = vpow.pop %v1660
  %v1662 = vmul.f32 %v1659, 1.442695
  %v1663 = vpow.pop %v1662
  %v1664 = vadd.f32 %v1661, 1.0
  %v1665 = vadd.f32 %v1663, 1.0
  %v1666 = vrcp.pop %v1664
  %v1667 = vmul.f32 %v1664, %v1666
  %v1668 = vsub.f32 1.0, %v1667
  %v1669 = vmul.f32 %v1666, %v1668
  %v1670 = vadd.f32 %v1666, %v1669
  %vm1671 = vweird.f32 %v1664
  %vm1672 = vweird.f32 %v1666
  %vm1673 = vmor %vm1671, %vm1672
  %v1674 = vsel %vm1673, %v1666, %v1670
  %v1675 = vand.u32 2147483647, %v1664
  %vm1676 = vcmp.eq.f32.partialorder %v1675, 8.507059e+37
  %v1677 = vand.u32 %v1664, 2147483648
  %v1678 = vor.u32 1.1754944e-38, %v1677
  %v1679 = vsel %vm1676, %v1678, %v1674
  %v1680 = vmul.f32 1.0, %v1679
  %v1681 = vrcp.pop %v1665
  %v1682 = vmul.f32 %v1665, %v1681
  %v1683 = vsub.f32 1.0, %v1682
  %v1684 = vmul.f32 %v1681, %v1683
  %v1685 = vadd.f32 %v1681, %v1684
  %vm1686 = vweird.f32 %v1665
  %vm1687 = vweird.f32 %v1681
  %vm1688 = vmor %vm1686, %vm1687
  %v1689 = vsel %vm1688, %v1681, %v1685
  %v1690 = vand.u32 2147483647, %v1665
  %vm1691 = vcmp.eq.f32.partialorder %v1690, 8.507059e+37
  %v1692 = vand.u32 %v1665, 2147483648
  %v1693 = vor.u32 1.1754944e-38, %v1692
  %v1694 = vsel %vm1691, %v1693, %v1689
  %v1695 = vmul.f32 1.0, %v1694
  %1696 = vst [vmem:[%s7] sm:$0xff] %v1680
  %1697 = vst [vmem:[%s7 + $0x8] sm:$0xff] %v1695
  // Predicated region
  $region30: #{trigger_forward_pallas.1} parent=0 // pred_check
    _
  $region31: #{trigger_forward_pallas.1} parent=0 // pred_check_branch
    %1699 = sbr.rel (0) target = $region33
  $region32: #{trigger_forward_pallas.1} parent=0 // pred_region
    _
  $region33: #{trigger_forward_pallas.1} parent=0 // pred_fallthru
    _
  // Predicated region
  $region34: #{trigger_forward_pallas.1} parent=0 // pred_check
    _
  $region35: #{trigger_forward_pallas.1} parent=0 // pred_check_branch
    %1701 = sbr.rel (0) target = $region37
  $region36: #{trigger_forward_pallas.1} parent=0 // pred_region
    _
  $region37: #{trigger_forward_pallas.1} parent=0 // pred_fallthru
    _

</llo_original>
